<compile_context>
chip_gen: v7x
topology: tpu7x:2x2x1
jax: 0.10.0
libtpu: 0.0.40
codegen_flags: <defaults>
</compile_context>

<pallas_src>
import numpy as np
import jax
import jax.numpy as jnp
from jax.experimental import pallas as pl
from jax.experimental.pallas import tpu as pltpu

INV_INT16 = float(1.0 / 32768.0)
LANE = 128


def _round_up(x, m):
    return (x + m - 1) // m * m


# ----------------------------------------------------------------------------
# Fused Pallas kernel: STFT matmul -> (identity mask) -> iSTFT/OLA matmul ->
# clamp * 32767 -> int16
# ----------------------------------------------------------------------------
def _fused_kernel(x_ref, a_ref, b_ref, o_ref):
    # x_ref: (1, C, T) int16 raw samples
    # a_ref: (T, F*128) f32  analysis matrix (pad + framing + Hann + 1/32768 folded in)
    # b_ref: (F*128, T) f32  synthesis matrix (windowed iDFT + OLA + 1/sum(w^2) folded in)
    # o_ref: (1, C, T) int16 output audio

    # int16 -> f32 via the natively supported s16 -> s32 -> f32 path.
    x = x_ref[0].astype(jnp.int32).astype(jnp.float32)                     # (C, T)

    # STFT of all frames / channels: one lane-dense MXU matmul.
    spec = jnp.dot(x, a_ref[...], preferred_element_type=jnp.float32)      # (C, F*128)

    # TODO(synk): mel_band_roformer mask-estimation network is external and its
    # internals are not provided; identity mask on the packed [re|im] spectrum.
    spec_masked = spec

    # Windowed iDFT + overlap-add + window-square-sum normalization: one matmul.
    rec = jnp.dot(spec_masked, b_ref[...], preferred_element_type=jnp.float32)  # (C, T)

    # clamp(-1, 1) * 32767 -> int16 (truncation toward zero, matching torch .to(int16))
    o_ref[0] = (jnp.clip(rec, -1.0, 1.0) * 32767.0).astype(jnp.int16)


def fused_forward(audio_i16, a_mat, b_mat):
    _, C, T = audio_i16.shape
    return pl.pallas_call(
        _fused_kernel,
        out_shape=jax.ShapeDtypeStruct((1, C, T), jnp.int16),
        in_specs=[
            pl.BlockSpec(memory_space=pltpu.MemorySpace.VMEM),   # audio (whole array)
            pl.BlockSpec(memory_space=pltpu.MemorySpace.VMEM),   # A
            pl.BlockSpec(memory_space=pltpu.MemorySpace.VMEM),   # B
        ],
        out_specs=pl.BlockSpec(memory_space=pltpu.MemorySpace.VMEM),
    )(audio_i16, a_mat, b_mat)


# ----------------------------------------------------------------------------
# Module wrapper: precomputes the fused analysis / synthesis matrices.
# ----------------------------------------------------------------------------
class MelBandRoformerModifiedPallas:
    def __init__(self, nfft=64, hop=16, max_signal_len=256):
        assert nfft % hop == 0
        self.nfft = nfft
        self.hop = hop
        self.T = max_signal_len
        self.nfreq = nfft // 2 + 1                      # K = 33
        self.pad = nfft // 2                            # center padding
        tp = max_signal_len + 2 * self.pad              # padded length
        self.n_frames = (tp - nfft) // hop + 1          # F = 17
        kp2 = _round_up(2 * self.nfreq, LANE)           # 128 lanes per frame block
        self.kp2 = kp2
        FK = self.n_frames * kp2                        # 2176

        n = np.arange(nfft)
        k = np.arange(self.nfreq)
        ang = 2.0 * np.pi * np.outer(n, k) / nfft       # (N, K)
        window = 0.5 - 0.5 * np.cos(2.0 * np.pi * n / nfft)

        # Analysis rows (per in-frame sample): Hann window and 1/32768 folded in.
        wr = INV_INT16 * window[:, None] * np.cos(ang)                       # (N, K)
        wi = -INV_INT16 * window[:, None] * np.sin(ang)                      # (N, K)

        # Windowed one-sided iDFT columns (ck trick for real signals).
        ck = np.ones(self.nfreq, dtype=np.float64)
        ck[1:-1] = 2.0
        br = (ck[:, None] * np.cos(ang.T)) / nfft * window[None, :]          # (K, N)
        bi = (-ck[:, None] * np.sin(ang.T)) / nfft * window[None, :]         # (K, N)

        # OLA window-square-sum normalization over the un-padded output range.
        wsum = np.zeros(tp, np.float64)
        for f in range(self.n_frames):
            wsum[f * hop:f * hop + nfft] += window ** 2
        inv_norm = 1.0 / np.maximum(wsum[self.pad:self.pad + self.T], 1e-8)  # (T,)

        # Build fused matrices (constant pad => out-of-range samples contribute 0).
        A = np.zeros((self.T, FK), np.float64)   # audio(T) -> packed spectrum(F*128)
        B = np.zeros((FK, self.T), np.float64)   # packed spectrum -> normalized audio
        for f in range(self.n_frames):
            c0 = f * kp2
            for s in range(nfft):
                t = f * hop + s - self.pad
                if 0 <= t < self.T:
                    A[t, c0:c0 + self.nfreq] = wr[s]
                    A[t, c0 + self.nfreq:c0 + 2 * self.nfreq] = wi[s]
                    B[c0:c0 + self.nfreq, t] = br[:, s] * inv_norm[t]
                    B[c0 + self.nfreq:c0 + 2 * self.nfreq, t] = bi[:, s] * inv_norm[t]
        self.A = jnp.asarray(A, dtype=jnp.float32)    # (256, 2176) ~2.2 MB
        self.B = jnp.asarray(B, dtype=jnp.float32)    # (2176, 256) ~2.2 MB

        # Mirrors the torch module's `self.zeros` buffer (an input of the external
        # mel_band_roformer, which is an identity placeholder inside the kernel).
        self.zeros = jnp.zeros((1, 1, self.nfreq * 2, max_signal_len, 2), dtype=jnp.int8)

        self._forward = jax.jit(fused_forward)

    def __call__(self, audio_i16):
        Bsz, C, T = audio_i16.shape
        assert Bsz == 1 and C == 2 and T == self.T
        return self._forward(audio_i16, self.A, self.B)     # (1, C, T) int16


def normalize_to_int16(audio_np):
    max_val = np.max(np.abs(audio_np))
    scaling_factor = 32767.0 / max_val if max_val > 0 else 1.0
    return (audio_np * float(scaling_factor)).astype(np.int16)


if __name__ == "__main__":
    T = 256
    key = jax.random.PRNGKey(0)
    audio_f = np.asarray(jax.random.uniform(key, (1, 2, T), jnp.float32,
                                            minval=-1.0, maxval=1.0))
    audio_i16 = jnp.asarray(normalize_to_int16(audio_f))                 # (1, 2, 256) int16

    model = MelBandRoformerModifiedPallas(nfft=64, hop=16, max_signal_len=T)
    out = jax.block_until_ready(model(audio_i16))

    assert out.shape == (1, 2, T) and out.dtype == jnp.int16
    # identity mask + exact OLA normalization => near-perfect int16 round trip
    err = int(np.max(np.abs(np.asarray(out, dtype=np.int32)
                            - np.asarray(audio_i16, dtype=np.int32))))
    assert err <= 4, f"reconstruction error too large: {err}"
    print("KERNEL_OK")
</pallas_src>

<mosaic_0001>
module attributes {stable_mosaic.version = 11 : i64} {
  func.func @_fused_kernel(%arg0: memref<1x2x256xi16, #tpu.memory_space<vmem>>, %arg1: memref<256x2176xf32, #tpu.memory_space<vmem>>, %arg2: memref<2176x256xf32, #tpu.memory_space<vmem>>, %arg3: memref<1x2x256xi16, #tpu.memory_space<vmem>>) attributes {dimension_semantics = [], scalar_prefetch = 0 : i64, scratch_operands = 0 : i64, tpu.core_type = #tpu.core_type<tc>} {
    %c0 = arith.constant 0 : index
    %c0_0 = arith.constant 0 : index
    %c0_1 = arith.constant 0 : index
    %0 = vector.load %arg0[%c0, %c0_0, %c0_1] : memref<1x2x256xi16, #tpu.memory_space<vmem>>, vector<1x2x256xi16>
    %1 = vector.shape_cast %0 : vector<1x2x256xi16> to vector<2x256xi16>
    %2 = arith.extsi %1 : vector<2x256xi16> to vector<2x256xi32>
    %3 = arith.sitofp %2 : vector<2x256xi32> to vector<2x256xf32>
    %c0_2 = arith.constant 0 : index
    %c0_3 = arith.constant 0 : index
    %4 = vector.load %arg1[%c0_2, %c0_3] : memref<256x2176xf32, #tpu.memory_space<vmem>>, vector<256x2176xf32>
    %cst = arith.constant dense<0.000000e+00> : vector<2x2176xf32>
    %5 = tpu.matmul %3, %4, %cst {dimension_numbers = #tpu.dot_dimension_numbers<[1], [0], [0], [1], [0, 0, 1, 1], [], []>} : vector<2x256xf32>, vector<256x2176xf32>, vector<2x2176xf32> -> vector<2x2176xf32>
    %c0_4 = arith.constant 0 : index
    %c0_5 = arith.constant 0 : index
    %6 = vector.load %arg2[%c0_4, %c0_5] : memref<2176x256xf32, #tpu.memory_space<vmem>>, vector<2176x256xf32>
    %cst_6 = arith.constant dense<0.000000e+00> : vector<2x256xf32>
    %7 = tpu.matmul %5, %6, %cst_6 {dimension_numbers = #tpu.dot_dimension_numbers<[1], [0], [0], [1], [0, 0, 1, 1], [], []>} : vector<2x2176xf32>, vector<2176x256xf32>, vector<2x256xf32> -> vector<2x256xf32>
    %cst_7 = arith.constant -1.000000e+00 : f32
    %cst_8 = arith.constant 1.000000e+00 : f32
    %8 = vector.broadcast %cst_7 : f32 to vector<2x256xf32>
    %9 = arith.maximumf %8, %7 : vector<2x256xf32>
    %10 = vector.broadcast %cst_8 : f32 to vector<2x256xf32>
    %11 = arith.minimumf %10, %9 : vector<2x256xf32>
    %cst_9 = arith.constant 3.276700e+04 : f32
    %12 = vector.broadcast %cst_9 : f32 to vector<2x256xf32>
    %13 = arith.mulf %11, %12 : vector<2x256xf32>
    %14 = arith.fptosi %13 : vector<2x256xf32> to vector<2x256xi16>
    %c0_10 = arith.constant 0 : index
    %c0_11 = arith.constant 0 : index
    %c0_12 = arith.constant 0 : index
    %15 = vector.load %arg3[%c0_10, %c0_11, %c0_12] : memref<1x2x256xi16, #tpu.memory_space<vmem>>, vector<1x2x256xi16>
    %16 = vector.shape_cast %15 : vector<1x2x256xi16> to vector<2x256xi16>
    %17 = vector.shape_cast %14 : vector<2x256xi16> to vector<1x2x256xi16>
    tpu.vector_store %arg3[%c0_10, %c0_11, %c0_12], %17 {strides = array<i32>} : memref<1x2x256xi16, #tpu.memory_space<vmem>>, vector<1x2x256xi16>,
    return
  }
}

</mosaic_0001>

<llo_original>
// kernel: fused_forward.1
$region0: #{fused_forward.1}
  #allocation0 [shape = 'u32[]', space=smem, size = 0x4, offset = 0x4, fixed_abs, tag = 'smem constant byte address 0x4 - core index']
  #allocation1 [shape = 'u32[144,128]{1,0:T(1,128)}', space=vmem, size = 0x12000, scoped, tag = 'internal scratch']
  %s0 = inlined_call_operand.hbm [shape: s16[1,2,256], index: 0, kind: input, shape index: {}]
  %s1 = inlined_call_operand.hbm [shape: f32[256,2176], index: 1, kind: input, shape index: {}]
  %s2 = inlined_call_operand.hbm [shape: f32[2176,256], index: 2, kind: input, shape index: {}]
  %s3 = inlined_call_operand.hbm [shape: s16[1,2,256], index: 3, kind: output, shape index: {}]
  %s4 = sld [smem:[#allocation0]]
  $region34: #{fused_forward.1} parent=0
    _
  %s6 = ssub.s32 1, %s4
  %s7 = scalar_select 0, %s6, %s4
  $region1: #{fused_forward.1} parent=0
    #allocation2 [shape = 'u8[1024]{0}', space=vmem, size = 0x400, scoped, tag = 'input window, operand 0, single buffered']
    #allocation3 [shape = 's32[1]{0}', space=sflag, size = 0x4, scoped, tag = 'scoped memory for fused_forward.1']
    #allocation4 [shape = 's32[1]{0}', space=sflag, size = 0x4, scoped, tag = 'scoped memory for fused_forward.1']
    #allocation5 [shape = 'u8[2228224]{0}', space=vmem, size = 0x220000, scoped, tag = 'input window, operand 1, single buffered']
    #allocation6 [shape = 's32[1]{0}', space=sflag, size = 0x4, scoped, tag = 'scoped memory for fused_forward.1']
    #allocation7 [shape = 'u8[2228224]{0}', space=vmem, size = 0x220000, scoped, tag = 'input window, operand 2, single buffered']
    #allocation8 [shape = 'u8[1024]{0}', space=vmem, size = 0x400, scoped, tag = 'output window, operand 0, single buffered']
    %8 = vsyncpa [#allocation3], 0
    %9 = vsyncpa [#allocation6], 0
    %10 = vsyncpa [#allocation4], 0
    // Predicated region
    $region2: #{fused_forward.1} parent=1 // pred_check
      _
    $region3: #{fused_forward.1} parent=1 // pred_check_branch
      %12 = sbr.rel (0) target = $region5
    $region4: #{fused_forward.1} parent=1 // pred_region
      %s14 = ssub.s32 32, 32
      %15 = vsyncadd [#allocation3], %s14
      %s17 = sshll.u32 [#allocation2], 4
      %s18 = int_to_ptr.vmem [resolvable:$true] %s17
      %20 = dma.hbm_to_vmem [thread:$0]  %s0, 32, %s18, [#allocation3]
    $region5: #{fused_forward.1} parent=1 // pred_fallthru
      _
    // Predicated region
    $region6: #{fused_forward.1} parent=1 // pred_check
      _
    $region7: #{fused_forward.1} parent=1 // pred_check_branch
      %22 = sbr.rel (0) target = $region9
    $region8: #{fused_forward.1} parent=1 // pred_region
      %s24 = ssub.s32 69632, 69632
      %25 = vsyncadd [#allocation6], %s24
      %s26 = sshll.u32 [#allocation5], 4
      %s27 = int_to_ptr.vmem [resolvable:$true] %s26
      %32 = dma.hbm_to_vmem [thread:$0]  %s1, 69632, %s27, [#allocation6], 2176, 2176, 136
    $region9: #{fused_forward.1} parent=1 // pred_fallthru
      _
    // Predicated region
    $region10: #{fused_forward.1} parent=1 // pred_check
      _
    $region11: #{fused_forward.1} parent=1 // pred_check_branch
      %34 = sbr.rel (0) target = $region13
    $region12: #{fused_forward.1} parent=1 // pred_region
      %s36 = ssub.s32 69632, 69632
      %37 = vsyncadd [#allocation6], %s36
      %s38 = sshll.u32 [#allocation7], 4
      %s39 = int_to_ptr.vmem [resolvable:$true] %s38
      %44 = dma.hbm_to_vmem [thread:$0]  %s2, 69632, %s39, [#allocation6], 256, 256, 16
    $region13: #{fused_forward.1} parent=1 // pred_fallthru
      _
    // Predicated region
    $region14: #{fused_forward.1} parent=1 // pred_check
      _
    $region15: #{fused_forward.1} parent=1 // pred_check_branch
      %46 = sbr.rel (0) target = $region17
    $region16: #{fused_forward.1} parent=1 // pred_region
      %47 = dma.done [#allocation3], 32
    $region17: #{fused_forward.1} parent=1 // pred_fallthru
      _
    // Predicated region
    $region18: #{fused_forward.1} parent=1 // pred_check
      _
    $region19: #{fused_forward.1} parent=1 // pred_check_branch
      %49 = sbr.rel (0) target = $region21
    $region20: #{fused_forward.1} parent=1 // pred_region
      %50 = dma.done [#allocation6], 69632
    $region21: #{fused_forward.1} parent=1 // pred_fallthru
      _
    // Predicated region
    $region22: #{fused_forward.1} parent=1 // pred_check
      _
    $region23: #{fused_forward.1} parent=1 // pred_check_branch
      %52 = sbr.rel (0) target = $region25
    $region24: #{fused_forward.1} parent=1 // pred_region
      %53 = dma.done [#allocation6], 69632
    $region25: #{fused_forward.1} parent=1 // pred_fallthru
      _
    %v54 = vld [vmem:[#allocation2] sm:$0x3]
    %v55 = vunpack.c.l.b16 %v54
    %v56 = vcvt.s32.f32 %v55
    %v57 = vld [vmem:[#allocation5] sm:$0xff]
    %v58 = vld [vmem:[#allocation5 + $0x8] sm:$0xff]
    %v59 = vld [vmem:[#allocation5 + $0x10] sm:$0xff]
    %v60 = vld [vmem:[#allocation5 + $0x18] sm:$0xff]
    %v61 = vld [vmem:[#allocation5 + $0x20] sm:$0xff]
    %v62 = vld [vmem:[#allocation5 + $0x28] sm:$0xff]
    %v63 = vld [vmem:[#allocation5 + $0x30] sm:$0xff]
    %v64 = vld [vmem:[#allocation5 + $0x38] sm:$0xff]
    %v65 = vld [vmem:[#allocation5 + $0x40] sm:$0xff]
    %v66 = vld [vmem:[#allocation5 + $0x48] sm:$0xff]
    %v67 = vld [vmem:[#allocation5 + $0x50] sm:$0xff]
    %v68 = vld [vmem:[#allocation5 + $0x58] sm:$0xff]
    %v69 = vld [vmem:[#allocation5 + $0x60] sm:$0xff]
    %v70 = vld [vmem:[#allocation5 + $0x68] sm:$0xff]
    %v71 = vld [vmem:[#allocation5 + $0x70] sm:$0xff]
    %v72 = vld [vmem:[#allocation5 + $0x78] sm:$0xff]
    %v73 = vld [vmem:[#allocation5 + $0x80] sm:$0xff]
    %v74 = vld [vmem:[#allocation5 + $0x88] sm:$0xff]
    %v75 = vld [vmem:[#allocation5 + $0x90] sm:$0xff]
    %v76 = vld [vmem:[#allocation5 + $0x98] sm:$0xff]
    %v77 = vld [vmem:[#allocation5 + $0xa0] sm:$0xff]
    %v78 = vld [vmem:[#allocation5 + $0xa8] sm:$0xff]
    %v79 = vld [vmem:[#allocation5 + $0xb0] sm:$0xff]
    %v80 = vld [vmem:[#allocation5 + $0xb8] sm:$0xff]
    %v81 = vld [vmem:[#allocation5 + $0xc0] sm:$0xff]
    %v82 = vld [vmem:[#allocation5 + $0xc8] sm:$0xff]
    %v83 = vld [vmem:[#allocation5 + $0xd0] sm:$0xff]
    %v84 = vld [vmem:[#allocation5 + $0xd8] sm:$0xff]
    %v85 = vld [vmem:[#allocation5 + $0xe0] sm:$0xff]
    %v86 = vld [vmem:[#allocation5 + $0xe8] sm:$0xff]
    %v87 = vld [vmem:[#allocation5 + $0xf0] sm:$0xff]
    %v88 = vld [vmem:[#allocation5 + $0xf8] sm:$0xff]
    %v89 = vld [vmem:[#allocation5 + $0x100] sm:$0xff]
    %v90 = vld [vmem:[#allocation5 + $0x108] sm:$0xff]
    %v91 = vld [vmem:[#allocation5 + $0x110] sm:$0xff]
    %v92 = vld [vmem:[#allocation5 + $0x118] sm:$0xff]
    %v93 = vld [vmem:[#allocation5 + $0x120] sm:$0xff]
    %v94 = vld [vmem:[#allocation5 + $0x128] sm:$0xff]
    %v95 = vld [vmem:[#allocation5 + $0x130] sm:$0xff]
    %v96 = vld [vmem:[#allocation5 + $0x138] sm:$0xff]
    %v97 = vld [vmem:[#allocation5 + $0x140] sm:$0xff]
    %v98 = vld [vmem:[#allocation5 + $0x148] sm:$0xff]
    %v99 = vld [vmem:[#allocation5 + $0x150] sm:$0xff]
    %v100 = vld [vmem:[#allocation5 + $0x158] sm:$0xff]
    %v101 = vld [vmem:[#allocation5 + $0x160] sm:$0xff]
    %v102 = vld [vmem:[#allocation5 + $0x168] sm:$0xff]
    %v103 = vld [vmem:[#allocation5 + $0x170] sm:$0xff]
    %v104 = vld [vmem:[#allocation5 + $0x178] sm:$0xff]
    %v105 = vld [vmem:[#allocation5 + $0x180] sm:$0xff]
    %v106 = vld [vmem:[#allocation5 + $0x188] sm:$0xff]
    %v107 = vld [vmem:[#allocation5 + $0x190] sm:$0xff]
    %v108 = vld [vmem:[#allocation5 + $0x198] sm:$0xff]
    %v109 = vld [vmem:[#allocation5 + $0x1a0] sm:$0xff]
    %v110 = vld [vmem:[#allocation5 + $0x1a8] sm:$0xff]
    %v111 = vld [vmem:[#allocation5 + $0x1b0] sm:$0xff]
    %v112 = vld [vmem:[#allocation5 + $0x1b8] sm:$0xff]
    %v113 = vld [vmem:[#allocation5 + $0x1c0] sm:$0xff]
    %v114 = vld [vmem:[#allocation5 + $0x1c8] sm:$0xff]
    %v115 = vld [vmem:[#allocation5 + $0x1d0] sm:$0xff]
    %v116 = vld [vmem:[#allocation5 + $0x1d8] sm:$0xff]
    %v117 = vld [vmem:[#allocation5 + $0x1e0] sm:$0xff]
    %v118 = vld [vmem:[#allocation5 + $0x1e8] sm:$0xff]
    %v119 = vld [vmem:[#allocation5 + $0x1f0] sm:$0xff]
    %v120 = vld [vmem:[#allocation5 + $0x1f8] sm:$0xff]
    %v121 = vld [vmem:[#allocation5 + $0x200] sm:$0xff]
    %v122 = vld [vmem:[#allocation5 + $0x208] sm:$0xff]
    %v123 = vld [vmem:[#allocation5 + $0x210] sm:$0xff]
    %v124 = vld [vmem:[#allocation5 + $0x218] sm:$0xff]
    %v125 = vld [vmem:[#allocation5 + $0x220] sm:$0xff]
    %v126 = vld [vmem:[#allocation5 + $0x228] sm:$0xff]
    %v127 = vld [vmem:[#allocation5 + $0x230] sm:$0xff]
    %v128 = vld [vmem:[#allocation5 + $0x238] sm:$0xff]
    %v129 = vld [vmem:[#allocation5 + $0x240] sm:$0xff]
    %v130 = vld [vmem:[#allocation5 + $0x248] sm:$0xff]
    %v131 = vld [vmem:[#allocation5 + $0x250] sm:$0xff]
    %v132 = vld [vmem:[#allocation5 + $0x258] sm:$0xff]
    %v133 = vld [vmem:[#allocation5 + $0x260] sm:$0xff]
    %v134 = vld [vmem:[#allocation5 + $0x268] sm:$0xff]
    %v135 = vld [vmem:[#allocation5 + $0x270] sm:$0xff]
    %v136 = vld [vmem:[#allocation5 + $0x278] sm:$0xff]
    %v137 = vld [vmem:[#allocation5 + $0x280] sm:$0xff]
    %v138 = vld [vmem:[#allocation5 + $0x288] sm:$0xff]
    %v139 = vld [vmem:[#allocation5 + $0x290] sm:$0xff]
    %v140 = vld [vmem:[#allocation5 + $0x298] sm:$0xff]
    %v141 = vld [vmem:[#allocation5 + $0x2a0] sm:$0xff]
    %v142 = vld [vmem:[#allocation5 + $0x2a8] sm:$0xff]
    %v143 = vld [vmem:[#allocation5 + $0x2b0] sm:$0xff]
    %v144 = vld [vmem:[#allocation5 + $0x2b8] sm:$0xff]
    %v145 = vld [vmem:[#allocation5 + $0x2c0] sm:$0xff]
    %v146 = vld [vmem:[#allocation5 + $0x2c8] sm:$0xff]
    %v147 = vld [vmem:[#allocation5 + $0x2d0] sm:$0xff]
    %v148 = vld [vmem:[#allocation5 + $0x2d8] sm:$0xff]
    %v149 = vld [vmem:[#allocation5 + $0x2e0] sm:$0xff]
    %v150 = vld [vmem:[#allocation5 + $0x2e8] sm:$0xff]
    %v151 = vld [vmem:[#allocation5 + $0x2f0] sm:$0xff]
    %v152 = vld [vmem:[#allocation5 + $0x2f8] sm:$0xff]
    %v153 = vld [vmem:[#allocation5 + $0x300] sm:$0xff]
    %v154 = vld [vmem:[#allocation5 + $0x308] sm:$0xff]
    %v155 = vld [vmem:[#allocation5 + $0x310] sm:$0xff]
    %v156 = vld [vmem:[#allocation5 + $0x318] sm:$0xff]
    %v157 = vld [vmem:[#allocation5 + $0x320] sm:$0xff]
    %v158 = vld [vmem:[#allocation5 + $0x328] sm:$0xff]
    %v159 = vld [vmem:[#allocation5 + $0x330] sm:$0xff]
    %v160 = vld [vmem:[#allocation5 + $0x338] sm:$0xff]
    %v161 = vld [vmem:[#allocation5 + $0x340] sm:$0xff]
    %v162 = vld [vmem:[#allocation5 + $0x348] sm:$0xff]
    %v163 = vld [vmem:[#allocation5 + $0x350] sm:$0xff]
    %v164 = vld [vmem:[#allocation5 + $0x358] sm:$0xff]
    %v165 = vld [vmem:[#allocation5 + $0x360] sm:$0xff]
    %v166 = vld [vmem:[#allocation5 + $0x368] sm:$0xff]
    %v167 = vld [vmem:[#allocation5 + $0x370] sm:$0xff]
    %v168 = vld [vmem:[#allocation5 + $0x378] sm:$0xff]
    %v169 = vld [vmem:[#allocation5 + $0x380] sm:$0xff]
    %v170 = vld [vmem:[#allocation5 + $0x388] sm:$0xff]
    %v171 = vld [vmem:[#allocation5 + $0x390] sm:$0xff]
    %v172 = vld [vmem:[#allocation5 + $0x398] sm:$0xff]
    %v173 = vld [vmem:[#allocation5 + $0x3a0] sm:$0xff]
    %v174 = vld [vmem:[#allocation5 + $0x3a8] sm:$0xff]
    %v175 = vld [vmem:[#allocation5 + $0x3b0] sm:$0xff]
    %v176 = vld [vmem:[#allocation5 + $0x3b8] sm:$0xff]
    %v177 = vld [vmem:[#allocation5 + $0x3c0] sm:$0xff]
    %v178 = vld [vmem:[#allocation5 + $0x3c8] sm:$0xff]
    %v179 = vld [vmem:[#allocation5 + $0x3d0] sm:$0xff]
    %v180 = vld [vmem:[#allocation5 + $0x3d8] sm:$0xff]
    %v181 = vld [vmem:[#allocation5 + $0x3e0] sm:$0xff]
    %v182 = vld [vmem:[#allocation5 + $0x3e8] sm:$0xff]
    %v183 = vld [vmem:[#allocation5 + $0x3f0] sm:$0xff]
    %v184 = vld [vmem:[#allocation5 + $0x3f8] sm:$0xff]
    %v185 = vld [vmem:[#allocation5 + $0x400] sm:$0xff]
    %v186 = vld [vmem:[#allocation5 + $0x408] sm:$0xff]
    %v187 = vld [vmem:[#allocation5 + $0x410] sm:$0xff]
    %v188 = vld [vmem:[#allocation5 + $0x418] sm:$0xff]
    %v189 = vld [vmem:[#allocation5 + $0x420] sm:$0xff]
    %v190 = vld [vmem:[#allocation5 + $0x428] sm:$0xff]
    %v191 = vld [vmem:[#allocation5 + $0x430] sm:$0xff]
    %v192 = vld [vmem:[#allocation5 + $0x438] sm:$0xff]
    %v193 = vld [vmem:[#allocation5 + $0x440] sm:$0xff]
    %v194 = vld [vmem:[#allocation5 + $0x448] sm:$0xff]
    %v195 = vld [vmem:[#allocation5 + $0x450] sm:$0xff]
    %v196 = vld [vmem:[#allocation5 + $0x458] sm:$0xff]
    %v197 = vld [vmem:[#allocation5 + $0x460] sm:$0xff]
    %v198 = vld [vmem:[#allocation5 + $0x468] sm:$0xff]
    %v199 = vld [vmem:[#allocation5 + $0x470] sm:$0xff]
    %v200 = vld [vmem:[#allocation5 + $0x478] sm:$0xff]
    %v201 = vld [vmem:[#allocation5 + $0x480] sm:$0xff]
    %v202 = vld [vmem:[#allocation5 + $0x488] sm:$0xff]
    %v203 = vld [vmem:[#allocation5 + $0x490] sm:$0xff]
    %v204 = vld [vmem:[#allocation5 + $0x498] sm:$0xff]
    %v205 = vld [vmem:[#allocation5 + $0x4a0] sm:$0xff]
    %v206 = vld [vmem:[#allocation5 + $0x4a8] sm:$0xff]
    %v207 = vld [vmem:[#allocation5 + $0x4b0] sm:$0xff]
    %v208 = vld [vmem:[#allocation5 + $0x4b8] sm:$0xff]
    %v209 = vld [vmem:[#allocation5 + $0x4c0] sm:$0xff]
    %v210 = vld [vmem:[#allocation5 + $0x4c8] sm:$0xff]
    %v211 = vld [vmem:[#allocation5 + $0x4d0] sm:$0xff]
    %v212 = vld [vmem:[#allocation5 + $0x4d8] sm:$0xff]
    %v213 = vld [vmem:[#allocation5 + $0x4e0] sm:$0xff]
    %v214 = vld [vmem:[#allocation5 + $0x4e8] sm:$0xff]
    %v215 = vld [vmem:[#allocation5 + $0x4f0] sm:$0xff]
    %v216 = vld [vmem:[#allocation5 + $0x4f8] sm:$0xff]
    %v217 = vld [vmem:[#allocation5 + $0x500] sm:$0xff]
    %v218 = vld [vmem:[#allocation5 + $0x508] sm:$0xff]
    %v219 = vld [vmem:[#allocation5 + $0x510] sm:$0xff]
    %v220 = vld [vmem:[#allocation5 + $0x518] sm:$0xff]
    %v221 = vld [vmem:[#allocation5 + $0x520] sm:$0xff]
    %v222 = vld [vmem:[#allocation5 + $0x528] sm:$0xff]
    %v223 = vld [vmem:[#allocation5 + $0x530] sm:$0xff]
    %v224 = vld [vmem:[#allocation5 + $0x538] sm:$0xff]
    %v225 = vld [vmem:[#allocation5 + $0x540] sm:$0xff]
    %v226 = vld [vmem:[#allocation5 + $0x548] sm:$0xff]
    %v227 = vld [vmem:[#allocation5 + $0x550] sm:$0xff]
    %v228 = vld [vmem:[#allocation5 + $0x558] sm:$0xff]
    %v229 = vld [vmem:[#allocation5 + $0x560] sm:$0xff]
    %v230 = vld [vmem:[#allocation5 + $0x568] sm:$0xff]
    %v231 = vld [vmem:[#allocation5 + $0x570] sm:$0xff]
    %v232 = vld [vmem:[#allocation5 + $0x578] sm:$0xff]
    %v233 = vld [vmem:[#allocation5 + $0x580] sm:$0xff]
    %v234 = vld [vmem:[#allocation5 + $0x588] sm:$0xff]
    %v235 = vld [vmem:[#allocation5 + $0x590] sm:$0xff]
    %v236 = vld [vmem:[#allocation5 + $0x598] sm:$0xff]
    %v237 = vld [vmem:[#allocation5 + $0x5a0] sm:$0xff]
    %v238 = vld [vmem:[#allocation5 + $0x5a8] sm:$0xff]
    %v239 = vld [vmem:[#allocation5 + $0x5b0] sm:$0xff]
    %v240 = vld [vmem:[#allocation5 + $0x5b8] sm:$0xff]
    %v241 = vld [vmem:[#allocation5 + $0x5c0] sm:$0xff]
    %v242 = vld [vmem:[#allocation5 + $0x5c8] sm:$0xff]
    %v243 = vld [vmem:[#allocation5 + $0x5d0] sm:$0xff]
    %v244 = vld [vmem:[#allocation5 + $0x5d8] sm:$0xff]
    %v245 = vld [vmem:[#allocation5 + $0x5e0] sm:$0xff]
    %v246 = vld [vmem:[#allocation5 + $0x5e8] sm:$0xff]
    %v247 = vld [vmem:[#allocation5 + $0x5f0] sm:$0xff]
    %v248 = vld [vmem:[#allocation5 + $0x5f8] sm:$0xff]
    %v249 = vld [vmem:[#allocation5 + $0x600] sm:$0xff]
    %v250 = vld [vmem:[#allocation5 + $0x608] sm:$0xff]
    %v251 = vld [vmem:[#allocation5 + $0x610] sm:$0xff]
    %v252 = vld [vmem:[#allocation5 + $0x618] sm:$0xff]
    %v253 = vld [vmem:[#allocation5 + $0x620] sm:$0xff]
    %v254 = vld [vmem:[#allocation5 + $0x628] sm:$0xff]
    %v255 = vld [vmem:[#allocation5 + $0x630] sm:$0xff]
    %v256 = vld [vmem:[#allocation5 + $0x638] sm:$0xff]
    %v257 = vld [vmem:[#allocation5 + $0x640] sm:$0xff]
    %v258 = vld [vmem:[#allocation5 + $0x648] sm:$0xff]
    %v259 = vld [vmem:[#allocation5 + $0x650] sm:$0xff]
    %v260 = vld [vmem:[#allocation5 + $0x658] sm:$0xff]
    %v261 = vld [vmem:[#allocation5 + $0x660] sm:$0xff]
    %v262 = vld [vmem:[#allocation5 + $0x668] sm:$0xff]
    %v263 = vld [vmem:[#allocation5 + $0x670] sm:$0xff]
    %v264 = vld [vmem:[#allocation5 + $0x678] sm:$0xff]
    %v265 = vld [vmem:[#allocation5 + $0x680] sm:$0xff]
    %v266 = vld [vmem:[#allocation5 + $0x688] sm:$0xff]
    %v267 = vld [vmem:[#allocation5 + $0x690] sm:$0xff]
    %v268 = vld [vmem:[#allocation5 + $0x698] sm:$0xff]
    %v269 = vld [vmem:[#allocation5 + $0x6a0] sm:$0xff]
    %v270 = vld [vmem:[#allocation5 + $0x6a8] sm:$0xff]
    %v271 = vld [vmem:[#allocation5 + $0x6b0] sm:$0xff]
    %v272 = vld [vmem:[#allocation5 + $0x6b8] sm:$0xff]
    %v273 = vld [vmem:[#allocation5 + $0x6c0] sm:$0xff]
    %v274 = vld [vmem:[#allocation5 + $0x6c8] sm:$0xff]
    %v275 = vld [vmem:[#allocation5 + $0x6d0] sm:$0xff]
    %v276 = vld [vmem:[#allocation5 + $0x6d8] sm:$0xff]
    %v277 = vld [vmem:[#allocation5 + $0x6e0] sm:$0xff]
    %v278 = vld [vmem:[#allocation5 + $0x6e8] sm:$0xff]
    %v279 = vld [vmem:[#allocation5 + $0x6f0] sm:$0xff]
    %v280 = vld [vmem:[#allocation5 + $0x6f8] sm:$0xff]
    %v281 = vld [vmem:[#allocation5 + $0x700] sm:$0xff]
    %v282 = vld [vmem:[#allocation5 + $0x708] sm:$0xff]
    %v283 = vld [vmem:[#allocation5 + $0x710] sm:$0xff]
    %v284 = vld [vmem:[#allocation5 + $0x718] sm:$0xff]
    %v285 = vld [vmem:[#allocation5 + $0x720] sm:$0xff]
    %v286 = vld [vmem:[#allocation5 + $0x728] sm:$0xff]
    %v287 = vld [vmem:[#allocation5 + $0x730] sm:$0xff]
    %v288 = vld [vmem:[#allocation5 + $0x738] sm:$0xff]
    %v289 = vld [vmem:[#allocation5 + $0x740] sm:$0xff]
    %v290 = vld [vmem:[#allocation5 + $0x748] sm:$0xff]
    %v291 = vld [vmem:[#allocation5 + $0x750] sm:$0xff]
    %v292 = vld [vmem:[#allocation5 + $0x758] sm:$0xff]
    %v293 = vld [vmem:[#allocation5 + $0x760] sm:$0xff]
    %v294 = vld [vmem:[#allocation5 + $0x768] sm:$0xff]
    %v295 = vld [vmem:[#allocation5 + $0x770] sm:$0xff]
    %v296 = vld [vmem:[#allocation5 + $0x778] sm:$0xff]
    %v297 = vld [vmem:[#allocation5 + $0x780] sm:$0xff]
    %v298 = vld [vmem:[#allocation5 + $0x788] sm:$0xff]
    %v299 = vld [vmem:[#allocation5 + $0x790] sm:$0xff]
    %v300 = vld [vmem:[#allocation5 + $0x798] sm:$0xff]
    %v301 = vld [vmem:[#allocation5 + $0x7a0] sm:$0xff]
    %v302 = vld [vmem:[#allocation5 + $0x7a8] sm:$0xff]
    %v303 = vld [vmem:[#allocation5 + $0x7b0] sm:$0xff]
    %v304 = vld [vmem:[#allocation5 + $0x7b8] sm:$0xff]
    %v305 = vld [vmem:[#allocation5 + $0x7c0] sm:$0xff]
    %v306 = vld [vmem:[#allocation5 + $0x7c8] sm:$0xff]
    %v307 = vld [vmem:[#allocation5 + $0x7d0] sm:$0xff]
    %v308 = vld [vmem:[#allocation5 + $0x7d8] sm:$0xff]
    %v309 = vld [vmem:[#allocation5 + $0x7e0] sm:$0xff]
    %v310 = vld [vmem:[#allocation5 + $0x7e8] sm:$0xff]
    %v311 = vld [vmem:[#allocation5 + $0x7f0] sm:$0xff]
    %v312 = vld [vmem:[#allocation5 + $0x7f8] sm:$0xff]
    %v313 = vld [vmem:[#allocation5 + $0x800] sm:$0xff]
    %v314 = vld [vmem:[#allocation5 + $0x808] sm:$0xff]
    %v315 = vld [vmem:[#allocation5 + $0x810] sm:$0xff]
    %v316 = vld [vmem:[#allocation5 + $0x818] sm:$0xff]
    %v317 = vld [vmem:[#allocation5 + $0x820] sm:$0xff]
    %v318 = vld [vmem:[#allocation5 + $0x828] sm:$0xff]
    %v319 = vld [vmem:[#allocation5 + $0x830] sm:$0xff]
    %v320 = vld [vmem:[#allocation5 + $0x838] sm:$0xff]
    %v321 = vld [vmem:[#allocation5 + $0x840] sm:$0xff]
    %v322 = vld [vmem:[#allocation5 + $0x848] sm:$0xff]
    %v323 = vld [vmem:[#allocation5 + $0x850] sm:$0xff]
    %v324 = vld [vmem:[#allocation5 + $0x858] sm:$0xff]
    %v325 = vld [vmem:[#allocation5 + $0x860] sm:$0xff]
    %v326 = vld [vmem:[#allocation5 + $0x868] sm:$0xff]
    %v327 = vld [vmem:[#allocation5 + $0x870] sm:$0xff]
    %v328 = vld [vmem:[#allocation5 + $0x878] sm:$0xff]
    %v329 = vld [vmem:[#allocation5 + $0x880] sm:$0xff]
    %v330 = vld [vmem:[#allocation5 + $0x888] sm:$0xff]
    %v331 = vld [vmem:[#allocation5 + $0x890] sm:$0xff]
    %v332 = vld [vmem:[#allocation5 + $0x898] sm:$0xff]
    %v333 = vld [vmem:[#allocation5 + $0x8a0] sm:$0xff]
    %v334 = vld [vmem:[#allocation5 + $0x8a8] sm:$0xff]
    %v335 = vld [vmem:[#allocation5 + $0x8b0] sm:$0xff]
    %v336 = vld [vmem:[#allocation5 + $0x8b8] sm:$0xff]
    %v337 = vld [vmem:[#allocation5 + $0x8c0] sm:$0xff]
    %v338 = vld [vmem:[#allocation5 + $0x8c8] sm:$0xff]
    %v339 = vld [vmem:[#allocation5 + $0x8d0] sm:$0xff]
    %v340 = vld [vmem:[#allocation5 + $0x8d8] sm:$0xff]
    %v341 = vld [vmem:[#allocation5 + $0x8e0] sm:$0xff]
    %v342 = vld [vmem:[#allocation5 + $0x8e8] sm:$0xff]
    %v343 = vld [vmem:[#allocation5 + $0x8f0] sm:$0xff]
    %v344 = vld [vmem:[#allocation5 + $0x8f8] sm:$0xff]
    %v345 = vld [vmem:[#allocation5 + $0x900] sm:$0xff]
    %v346 = vld [vmem:[#allocation5 + $0x908] sm:$0xff]
    %v347 = vld [vmem:[#allocation5 + $0x910] sm:$0xff]
    %v348 = vld [vmem:[#allocation5 + $0x918] sm:$0xff]
    %v349 = vld [vmem:[#allocation5 + $0x920] sm:$0xff]
    %v350 = vld [vmem:[#allocation5 + $0x928] sm:$0xff]
    %v351 = vld [vmem:[#allocation5 + $0x930] sm:$0xff]
    %v352 = vld [vmem:[#allocation5 + $0x938] sm:$0xff]
    %v353 = vld [vmem:[#allocation5 + $0x940] sm:$0xff]
    %v354 = vld [vmem:[#allocation5 + $0x948] sm:$0xff]
    %v355 = vld [vmem:[#allocation5 + $0x950] sm:$0xff]
    %v356 = vld [vmem:[#allocation5 + $0x958] sm:$0xff]
    %v357 = vld [vmem:[#allocation5 + $0x960] sm:$0xff]
    %v358 = vld [vmem:[#allocation5 + $0x968] sm:$0xff]
    %v359 = vld [vmem:[#allocation5 + $0x970] sm:$0xff]
    %v360 = vld [vmem:[#allocation5 + $0x978] sm:$0xff]
    %v361 = vld [vmem:[#allocation5 + $0x980] sm:$0xff]
    %v362 = vld [vmem:[#allocation5 + $0x988] sm:$0xff]
    %v363 = vld [vmem:[#allocation5 + $0x990] sm:$0xff]
    %v364 = vld [vmem:[#allocation5 + $0x998] sm:$0xff]
    %v365 = vld [vmem:[#allocation5 + $0x9a0] sm:$0xff]
    %v366 = vld [vmem:[#allocation5 + $0x9a8] sm:$0xff]
    %v367 = vld [vmem:[#allocation5 + $0x9b0] sm:$0xff]
    %v368 = vld [vmem:[#allocation5 + $0x9b8] sm:$0xff]
    %v369 = vld [vmem:[#allocation5 + $0x9c0] sm:$0xff]
    %v370 = vld [vmem:[#allocation5 + $0x9c8] sm:$0xff]
    %v371 = vld [vmem:[#allocation5 + $0x9d0] sm:$0xff]
    %v372 = vld [vmem:[#allocation5 + $0x9d8] sm:$0xff]
    %v373 = vld [vmem:[#allocation5 + $0x9e0] sm:$0xff]
    %v374 = vld [vmem:[#allocation5 + $0x9e8] sm:$0xff]
    %v375 = vld [vmem:[#allocation5 + $0x9f0] sm:$0xff]
    %v376 = vld [vmem:[#allocation5 + $0x9f8] sm:$0xff]
    %v377 = vld [vmem:[#allocation5 + $0xa00] sm:$0xff]
    %v378 = vld [vmem:[#allocation5 + $0xa08] sm:$0xff]
    %v379 = vld [vmem:[#allocation5 + $0xa10] sm:$0xff]
    %v380 = vld [vmem:[#allocation5 + $0xa18] sm:$0xff]
    %v381 = vld [vmem:[#allocation5 + $0xa20] sm:$0xff]
    %v382 = vld [vmem:[#allocation5 + $0xa28] sm:$0xff]
    %v383 = vld [vmem:[#allocation5 + $0xa30] sm:$0xff]
    %v384 = vld [vmem:[#allocation5 + $0xa38] sm:$0xff]
    %v385 = vld [vmem:[#allocation5 + $0xa40] sm:$0xff]
    %v386 = vld [vmem:[#allocation5 + $0xa48] sm:$0xff]
    %v387 = vld [vmem:[#allocation5 + $0xa50] sm:$0xff]
    %v388 = vld [vmem:[#allocation5 + $0xa58] sm:$0xff]
    %v389 = vld [vmem:[#allocation5 + $0xa60] sm:$0xff]
    %v390 = vld [vmem:[#allocation5 + $0xa68] sm:$0xff]
    %v391 = vld [vmem:[#allocation5 + $0xa70] sm:$0xff]
    %v392 = vld [vmem:[#allocation5 + $0xa78] sm:$0xff]
    %v393 = vld [vmem:[#allocation5 + $0xa80] sm:$0xff]
    %v394 = vld [vmem:[#allocation5 + $0xa88] sm:$0xff]
    %v395 = vld [vmem:[#allocation5 + $0xa90] sm:$0xff]
    %v396 = vld [vmem:[#allocation5 + $0xa98] sm:$0xff]
    %v397 = vld [vmem:[#allocation5 + $0xaa0] sm:$0xff]
    %v398 = vld [vmem:[#allocation5 + $0xaa8] sm:$0xff]
    %v399 = vld [vmem:[#allocation5 + $0xab0] sm:$0xff]
    %v400 = vld [vmem:[#allocation5 + $0xab8] sm:$0xff]
    %v401 = vld [vmem:[#allocation5 + $0xac0] sm:$0xff]
    %v402 = vld [vmem:[#allocation5 + $0xac8] sm:$0xff]
    %v403 = vld [vmem:[#allocation5 + $0xad0] sm:$0xff]
    %v404 = vld [vmem:[#allocation5 + $0xad8] sm:$0xff]
    %v405 = vld [vmem:[#allocation5 + $0xae0] sm:$0xff]
    %v406 = vld [vmem:[#allocation5 + $0xae8] sm:$0xff]
    %v407 = vld [vmem:[#allocation5 + $0xaf0] sm:$0xff]
    %v408 = vld [vmem:[#allocation5 + $0xaf8] sm:$0xff]
    %v409 = vld [vmem:[#allocation5 + $0xb00] sm:$0xff]
    %v410 = vld [vmem:[#allocation5 + $0xb08] sm:$0xff]
    %v411 = vld [vmem:[#allocation5 + $0xb10] sm:$0xff]
    %v412 = vld [vmem:[#allocation5 + $0xb18] sm:$0xff]
    %v413 = vld [vmem:[#allocation5 + $0xb20] sm:$0xff]
    %v414 = vld [vmem:[#allocation5 + $0xb28] sm:$0xff]
    %v415 = vld [vmem:[#allocation5 + $0xb30] sm:$0xff]
    %v416 = vld [vmem:[#allocation5 + $0xb38] sm:$0xff]
    %v417 = vld [vmem:[#allocation5 + $0xb40] sm:$0xff]
    %v418 = vld [vmem:[#allocation5 + $0xb48] sm:$0xff]
    %v419 = vld [vmem:[#allocation5 + $0xb50] sm:$0xff]
    %v420 = vld [vmem:[#allocation5 + $0xb58] sm:$0xff]
    %v421 = vld [vmem:[#allocation5 + $0xb60] sm:$0xff]
    %v422 = vld [vmem:[#allocation5 + $0xb68] sm:$0xff]
    %v423 = vld [vmem:[#allocation5 + $0xb70] sm:$0xff]
    %v424 = vld [vmem:[#allocation5 + $0xb78] sm:$0xff]
    %v425 = vld [vmem:[#allocation5 + $0xb80] sm:$0xff]
    %v426 = vld [vmem:[#allocation5 + $0xb88] sm:$0xff]
    %v427 = vld [vmem:[#allocation5 + $0xb90] sm:$0xff]
    %v428 = vld [vmem:[#allocation5 + $0xb98] sm:$0xff]
    %v429 = vld [vmem:[#allocation5 + $0xba0] sm:$0xff]
    %v430 = vld [vmem:[#allocation5 + $0xba8] sm:$0xff]
    %v431 = vld [vmem:[#allocation5 + $0xbb0] sm:$0xff]
    %v432 = vld [vmem:[#allocation5 + $0xbb8] sm:$0xff]
    %v433 = vld [vmem:[#allocation5 + $0xbc0] sm:$0xff]
    %v434 = vld [vmem:[#allocation5 + $0xbc8] sm:$0xff]
    %v435 = vld [vmem:[#allocation5 + $0xbd0] sm:$0xff]
    %v436 = vld [vmem:[#allocation5 + $0xbd8] sm:$0xff]
    %v437 = vld [vmem:[#allocation5 + $0xbe0] sm:$0xff]
    %v438 = vld [vmem:[#allocation5 + $0xbe8] sm:$0xff]
    %v439 = vld [vmem:[#allocation5 + $0xbf0] sm:$0xff]
    %v440 = vld [vmem:[#allocation5 + $0xbf8] sm:$0xff]
    %v441 = vld [vmem:[#allocation5 + $0xc00] sm:$0xff]
    %v442 = vld [vmem:[#allocation5 + $0xc08] sm:$0xff]
    %v443 = vld [vmem:[#allocation5 + $0xc10] sm:$0xff]
    %v444 = vld [vmem:[#allocation5 + $0xc18] sm:$0xff]
    %v445 = vld [vmem:[#allocation5 + $0xc20] sm:$0xff]
    %v446 = vld [vmem:[#allocation5 + $0xc28] sm:$0xff]
    %v447 = vld [vmem:[#allocation5 + $0xc30] sm:$0xff]
    %v448 = vld [vmem:[#allocation5 + $0xc38] sm:$0xff]
    %v449 = vld [vmem:[#allocation5 + $0xc40] sm:$0xff]
    %v450 = vld [vmem:[#allocation5 + $0xc48] sm:$0xff]
    %v451 = vld [vmem:[#allocation5 + $0xc50] sm:$0xff]
    %v452 = vld [vmem:[#allocation5 + $0xc58] sm:$0xff]
    %v453 = vld [vmem:[#allocation5 + $0xc60] sm:$0xff]
    %v454 = vld [vmem:[#allocation5 + $0xc68] sm:$0xff]
    %v455 = vld [vmem:[#allocation5 + $0xc70] sm:$0xff]
    %v456 = vld [vmem:[#allocation5 + $0xc78] sm:$0xff]
    %v457 = vld [vmem:[#allocation5 + $0xc80] sm:$0xff]
    %v458 = vld [vmem:[#allocation5 + $0xc88] sm:$0xff]
    %v459 = vld [vmem:[#allocation5 + $0xc90] sm:$0xff]
    %v460 = vld [vmem:[#allocation5 + $0xc98] sm:$0xff]
    %v461 = vld [vmem:[#allocation5 + $0xca0] sm:$0xff]
    %v462 = vld [vmem:[#allocation5 + $0xca8] sm:$0xff]
    %v463 = vld [vmem:[#allocation5 + $0xcb0] sm:$0xff]
    %v464 = vld [vmem:[#allocation5 + $0xcb8] sm:$0xff]
    %v465 = vld [vmem:[#allocation5 + $0xcc0] sm:$0xff]
    %v466 = vld [vmem:[#allocation5 + $0xcc8] sm:$0xff]
    %v467 = vld [vmem:[#allocation5 + $0xcd0] sm:$0xff]
    %v468 = vld [vmem:[#allocation5 + $0xcd8] sm:$0xff]
    %v469 = vld [vmem:[#allocation5 + $0xce0] sm:$0xff]
    %v470 = vld [vmem:[#allocation5 + $0xce8] sm:$0xff]
    %v471 = vld [vmem:[#allocation5 + $0xcf0] sm:$0xff]
    %v472 = vld [vmem:[#allocation5 + $0xcf8] sm:$0xff]
    %v473 = vld [vmem:[#allocation5 + $0xd00] sm:$0xff]
    %v474 = vld [vmem:[#allocation5 + $0xd08] sm:$0xff]
    %v475 = vld [vmem:[#allocation5 + $0xd10] sm:$0xff]
    %v476 = vld [vmem:[#allocation5 + $0xd18] sm:$0xff]
    %v477 = vld [vmem:[#allocation5 + $0xd20] sm:$0xff]
    %v478 = vld [vmem:[#allocation5 + $0xd28] sm:$0xff]
    %v479 = vld [vmem:[#allocation5 + $0xd30] sm:$0xff]
    %v480 = vld [vmem:[#allocation5 + $0xd38] sm:$0xff]
    %v481 = vld [vmem:[#allocation5 + $0xd40] sm:$0xff]
    %v482 = vld [vmem:[#allocation5 + $0xd48] sm:$0xff]
    %v483 = vld [vmem:[#allocation5 + $0xd50] sm:$0xff]
    %v484 = vld [vmem:[#allocation5 + $0xd58] sm:$0xff]
    %v485 = vld [vmem:[#allocation5 + $0xd60] sm:$0xff]
    %v486 = vld [vmem:[#allocation5 + $0xd68] sm:$0xff]
    %v487 = vld [vmem:[#allocation5 + $0xd70] sm:$0xff]
    %v488 = vld [vmem:[#allocation5 + $0xd78] sm:$0xff]
    %v489 = vld [vmem:[#allocation5 + $0xd80] sm:$0xff]
    %v490 = vld [vmem:[#allocation5 + $0xd88] sm:$0xff]
    %v491 = vld [vmem:[#allocation5 + $0xd90] sm:$0xff]
    %v492 = vld [vmem:[#allocation5 + $0xd98] sm:$0xff]
    %v493 = vld [vmem:[#allocation5 + $0xda0] sm:$0xff]
    %v494 = vld [vmem:[#allocation5 + $0xda8] sm:$0xff]
    %v495 = vld [vmem:[#allocation5 + $0xdb0] sm:$0xff]
    %v496 = vld [vmem:[#allocation5 + $0xdb8] sm:$0xff]
    %v497 = vld [vmem:[#allocation5 + $0xdc0] sm:$0xff]
    %v498 = vld [vmem:[#allocation5 + $0xdc8] sm:$0xff]
    %v499 = vld [vmem:[#allocation5 + $0xdd0] sm:$0xff]
    %v500 = vld [vmem:[#allocation5 + $0xdd8] sm:$0xff]
    %v501 = vld [vmem:[#allocation5 + $0xde0] sm:$0xff]
    %v502 = vld [vmem:[#allocation5 + $0xde8] sm:$0xff]
    %v503 = vld [vmem:[#allocation5 + $0xdf0] sm:$0xff]
    %v504 = vld [vmem:[#allocation5 + $0xdf8] sm:$0xff]
    %v505 = vld [vmem:[#allocation5 + $0xe00] sm:$0xff]
    %v506 = vld [vmem:[#allocation5 + $0xe08] sm:$0xff]
    %v507 = vld [vmem:[#allocation5 + $0xe10] sm:$0xff]
    %v508 = vld [vmem:[#allocation5 + $0xe18] sm:$0xff]
    %v509 = vld [vmem:[#allocation5 + $0xe20] sm:$0xff]
    %v510 = vld [vmem:[#allocation5 + $0xe28] sm:$0xff]
    %v511 = vld [vmem:[#allocation5 + $0xe30] sm:$0xff]
    %v512 = vld [vmem:[#allocation5 + $0xe38] sm:$0xff]
    %v513 = vld [vmem:[#allocation5 + $0xe40] sm:$0xff]
    %v514 = vld [vmem:[#allocation5 + $0xe48] sm:$0xff]
    %v515 = vld [vmem:[#allocation5 + $0xe50] sm:$0xff]
    %v516 = vld [vmem:[#allocation5 + $0xe58] sm:$0xff]
    %v517 = vld [vmem:[#allocation5 + $0xe60] sm:$0xff]
    %v518 = vld [vmem:[#allocation5 + $0xe68] sm:$0xff]
    %v519 = vld [vmem:[#allocation5 + $0xe70] sm:$0xff]
    %v520 = vld [vmem:[#allocation5 + $0xe78] sm:$0xff]
    %v521 = vld [vmem:[#allocation5 + $0xe80] sm:$0xff]
    %v522 = vld [vmem:[#allocation5 + $0xe88] sm:$0xff]
    %v523 = vld [vmem:[#allocation5 + $0xe90] sm:$0xff]
    %v524 = vld [vmem:[#allocation5 + $0xe98] sm:$0xff]
    %v525 = vld [vmem:[#allocation5 + $0xea0] sm:$0xff]
    %v526 = vld [vmem:[#allocation5 + $0xea8] sm:$0xff]
    %v527 = vld [vmem:[#allocation5 + $0xeb0] sm:$0xff]
    %v528 = vld [vmem:[#allocation5 + $0xeb8] sm:$0xff]
    %v529 = vld [vmem:[#allocation5 + $0xec0] sm:$0xff]
    %v530 = vld [vmem:[#allocation5 + $0xec8] sm:$0xff]
    %v531 = vld [vmem:[#allocation5 + $0xed0] sm:$0xff]
    %v532 = vld [vmem:[#allocation5 + $0xed8] sm:$0xff]
    %v533 = vld [vmem:[#allocation5 + $0xee0] sm:$0xff]
    %v534 = vld [vmem:[#allocation5 + $0xee8] sm:$0xff]
    %v535 = vld [vmem:[#allocation5 + $0xef0] sm:$0xff]
    %v536 = vld [vmem:[#allocation5 + $0xef8] sm:$0xff]
    %v537 = vld [vmem:[#allocation5 + $0xf00] sm:$0xff]
    %v538 = vld [vmem:[#allocation5 + $0xf08] sm:$0xff]
    %v539 = vld [vmem:[#allocation5 + $0xf10] sm:$0xff]
    %v540 = vld [vmem:[#allocation5 + $0xf18] sm:$0xff]
    %v541 = vld [vmem:[#allocation5 + $0xf20] sm:$0xff]
    %v542 = vld [vmem:[#allocation5 + $0xf28] sm:$0xff]
    %v543 = vld [vmem:[#allocation5 + $0xf30] sm:$0xff]
    %v544 = vld [vmem:[#allocation5 + $0xf38] sm:$0xff]
    %v545 = vld [vmem:[#allocation5 + $0xf40] sm:$0xff]
    %v546 = vld [vmem:[#allocation5 + $0xf48] sm:$0xff]
    %v547 = vld [vmem:[#allocation5 + $0xf50] sm:$0xff]
    %v548 = vld [vmem:[#allocation5 + $0xf58] sm:$0xff]
    %v549 = vld [vmem:[#allocation5 + $0xf60] sm:$0xff]
    %v550 = vld [vmem:[#allocation5 + $0xf68] sm:$0xff]
    %v551 = vld [vmem:[#allocation5 + $0xf70] sm:$0xff]
    %v552 = vld [vmem:[#allocation5 + $0xf78] sm:$0xff]
    %v553 = vld [vmem:[#allocation5 + $0xf80] sm:$0xff]
    %v554 = vld [vmem:[#allocation5 + $0xf88] sm:$0xff]
    %v555 = vld [vmem:[#allocation5 + $0xf90] sm:$0xff]
    %v556 = vld [vmem:[#allocation5 + $0xf98] sm:$0xff]
    %v557 = vld [vmem:[#allocation5 + $0xfa0] sm:$0xff]
    %v558 = vld [vmem:[#allocation5 + $0xfa8] sm:$0xff]
    %v559 = vld [vmem:[#allocation5 + $0xfb0] sm:$0xff]
    %v560 = vld [vmem:[#allocation5 + $0xfb8] sm:$0xff]
    %v561 = vld [vmem:[#allocation5 + $0xfc0] sm:$0xff]
    %v562 = vld [vmem:[#allocation5 + $0xfc8] sm:$0xff]
    %v563 = vld [vmem:[#allocation5 + $0xfd0] sm:$0xff]
    %v564 = vld [vmem:[#allocation5 + $0xfd8] sm:$0xff]
    %v565 = vld [vmem:[#allocation5 + $0xfe0] sm:$0xff]
    %v566 = vld [vmem:[#allocation5 + $0xfe8] sm:$0xff]
    %v567 = vld [vmem:[#allocation5 + $0xff0] sm:$0xff]
    %v568 = vld [vmem:[#allocation5 + $0xff8] sm:$0xff]
    %v569 = vld [vmem:[#allocation5 + $0x1000] sm:$0xff]
    %v570 = vld [vmem:[#allocation5 + $0x1008] sm:$0xff]
    %v571 = vld [vmem:[#allocation5 + $0x1010] sm:$0xff]
    %v572 = vld [vmem:[#allocation5 + $0x1018] sm:$0xff]
    %v573 = vld [vmem:[#allocation5 + $0x1020] sm:$0xff]
    %v574 = vld [vmem:[#allocation5 + $0x1028] sm:$0xff]
    %v575 = vld [vmem:[#allocation5 + $0x1030] sm:$0xff]
    %v576 = vld [vmem:[#allocation5 + $0x1038] sm:$0xff]
    %v577 = vld [vmem:[#allocation5 + $0x1040] sm:$0xff]
    %v578 = vld [vmem:[#allocation5 + $0x1048] sm:$0xff]
    %v579 = vld [vmem:[#allocation5 + $0x1050] sm:$0xff]
    %v580 = vld [vmem:[#allocation5 + $0x1058] sm:$0xff]
    %v581 = vld [vmem:[#allocation5 + $0x1060] sm:$0xff]
    %v582 = vld [vmem:[#allocation5 + $0x1068] sm:$0xff]
    %v583 = vld [vmem:[#allocation5 + $0x1070] sm:$0xff]
    %v584 = vld [vmem:[#allocation5 + $0x1078] sm:$0xff]
    %v585 = vld [vmem:[#allocation5 + $0x1080] sm:$0xff]
    %v586 = vld [vmem:[#allocation5 + $0x1088] sm:$0xff]
    %v587 = vld [vmem:[#allocation5 + $0x1090] sm:$0xff]
    %v588 = vld [vmem:[#allocation5 + $0x1098] sm:$0xff]
    %v589 = vld [vmem:[#allocation5 + $0x10a0] sm:$0xff]
    %v590 = vld [vmem:[#allocation5 + $0x10a8] sm:$0xff]
    %v591 = vld [vmem:[#allocation5 + $0x10b0] sm:$0xff]
    %v592 = vld [vmem:[#allocation5 + $0x10b8] sm:$0xff]
    %v593 = vld [vmem:[#allocation5 + $0x10c0] sm:$0xff]
    %v594 = vld [vmem:[#allocation5 + $0x10c8] sm:$0xff]
    %v595 = vld [vmem:[#allocation5 + $0x10d0] sm:$0xff]
    %v596 = vld [vmem:[#allocation5 + $0x10d8] sm:$0xff]
    %v597 = vld [vmem:[#allocation5 + $0x10e0] sm:$0xff]
    %v598 = vld [vmem:[#allocation5 + $0x10e8] sm:$0xff]
    %v599 = vld [vmem:[#allocation5 + $0x10f0] sm:$0xff]
    %v600 = vld [vmem:[#allocation5 + $0x10f8] sm:$0xff]
    %v603 = vunpack.c.l.s4 1983009808
    %v604 = vunpack.c.0.s8 %v603
    %v605 = vlaneseq
    %v606 = vshrl.u32 %v605, 7
    %v607 = vsub.s32 %v604, %v606
    %v608 = vrot.slane %v56, %v607
    %v609 = vcombine.high %v608, %v608
    %612 = vmatprep.subr.mxu0 %v58
    %613 = vmatpush1.msra.mxu0 %v57
    %614 = vmatprep.subr.mxu0 %v75
    %615 = vmatpush1.msra.mxu0 %v74
    %616 = vmatprep.subr.mxu0 %v92
    %617 = vmatpush1.msra.mxu0 %v91
    %618 = vmatprep.subr.mxu0 %v109
    %619 = vmatpush1.msra.mxu0 %v108
    %620 = vmatprep.subr.mxu0 %v126
    %621 = vmatpush1.msra.mxu0 %v125
    %622 = vmatprep.subr.mxu0 %v143
    %623 = vmatpush1.msra.mxu0 %v142
    %624 = vmatprep.subr.mxu0 %v160
    %625 = vmatpush1.msra.mxu0 %v159
    %626 = vmatprep.subr.mxu0 %v177
    %627 = vmatpush1.msra.mxu0 %v176
    %628 = vmatprep.subr.mxu0 %v194
    %629 = vmatpush1.msra.mxu0 %v193
    %630 = vmatprep.subr.mxu0 %v211
    %631 = vmatpush1.msra.mxu0 %v210
    %632 = vmatprep.subr.mxu0 %v228
    %633 = vmatpush1.msra.mxu0 %v227
    %634 = vmatprep.subr.mxu0 %v245
    %635 = vmatpush1.msra.mxu0 %v244
    %636 = vmatprep.subr.mxu0 %v262
    %637 = vmatpush1.msra.mxu0 %v261
    %638 = vmatprep.subr.mxu0 %v279
    %639 = vmatpush1.msra.mxu0 %v278
    %640 = vmatprep.subr.mxu0 %v296
    %641 = vmatpush1.msra.mxu0 %v295
    %642 = vmatprep.subr.mxu0 %v313
    %643 = vmatpush1.msra.mxu0 %v312
    %644 = vmatprep.subr.mxu0 %v330
    %645 = vmatpush1.msra.mxu0 %v329
    %646 = vmatprep.subr.mxu0 %v347
    %647 = vmatpush1.msra.mxu0 %v346
    %648 = vmatprep.subr.mxu0 %v364
    %649 = vmatpush1.msra.mxu0 %v363
    %650 = vmatprep.subr.mxu0 %v381
    %651 = vmatpush1.msra.mxu0 %v380
    %652 = vmatprep.subr.mxu0 %v398
    %653 = vmatpush1.msra.mxu0 %v397
    %654 = vmatprep.subr.mxu0 %v415
    %655 = vmatpush1.msra.mxu0 %v414
    %656 = vmatprep.subr.mxu0 %v432
    %657 = vmatpush1.msra.mxu0 %v431
    %658 = vmatprep.subr.mxu0 %v449
    %659 = vmatpush1.msra.mxu0 %v448
    %660 = vmatprep.subr.mxu0 %v466
    %661 = vmatpush1.msra.mxu0 %v465
    %662 = vmatprep.subr.mxu0 %v483
    %663 = vmatpush1.msra.mxu0 %v482
    %664 = vmatprep.subr.mxu0 %v500
    %665 = vmatpush1.msra.mxu0 %v499
    %666 = vmatprep.subr.mxu0 %v517
    %667 = vmatpush1.msra.mxu0 %v516
    %668 = vmatprep.subr.mxu0 %v534
    %669 = vmatpush1.msra.mxu0 %v533
    %670 = vmatprep.subr.mxu0 %v551
    %671 = vmatpush1.msra.mxu0 %v550
    %672 = vmatprep.subr.mxu0 %v568
    %673 = vmatpush1.msra.mxu0 %v567
    %674 = vmatprep.subr.mxu0 %v585
    %675 = vmatpush1.msra.mxu0 %v584
    %676 = vmatprep.mubr.f32.mxu0 %v609
    %677 = vmatmul.mubr.f32.gmra.mrb[0].mxu0 %v608
    %v678 = vpop.f32.mrb[0].mxu0
    %v679 = vadd.f32 0.0, %v678
    %v680 = vpop.f32.mrb[0].mxu0
    %v681 = vadd.f32 0.0, %v680
    %682 = vdwg.mxu0
    %683 = vmatprep.subr.mxu0 %v60
    %684 = vmatpush1.msra.mxu0 %v59
    %685 = vmatprep.subr.mxu0 %v77
    %686 = vmatpush1.msra.mxu0 %v76
    %687 = vmatprep.subr.mxu0 %v94
    %688 = vmatpush1.msra.mxu0 %v93
    %689 = vmatprep.subr.mxu0 %v111
    %690 = vmatpush1.msra.mxu0 %v110
    %691 = vmatprep.subr.mxu0 %v128
    %692 = vmatpush1.msra.mxu0 %v127
    %693 = vmatprep.subr.mxu0 %v145
    %694 = vmatpush1.msra.mxu0 %v144
    %695 = vmatprep.subr.mxu0 %v162
    %696 = vmatpush1.msra.mxu0 %v161
    %697 = vmatprep.subr.mxu0 %v179
    %698 = vmatpush1.msra.mxu0 %v178
    %699 = vmatprep.subr.mxu0 %v196
    %700 = vmatpush1.msra.mxu0 %v195
    %701 = vmatprep.subr.mxu0 %v213
    %702 = vmatpush1.msra.mxu0 %v212
    %703 = vmatprep.subr.mxu0 %v230
    %704 = vmatpush1.msra.mxu0 %v229
    %705 = vmatprep.subr.mxu0 %v247
    %706 = vmatpush1.msra.mxu0 %v246
    %707 = vmatprep.subr.mxu0 %v264
    %708 = vmatpush1.msra.mxu0 %v263
    %709 = vmatprep.subr.mxu0 %v281
    %710 = vmatpush1.msra.mxu0 %v280
    %711 = vmatprep.subr.mxu0 %v298
    %712 = vmatpush1.msra.mxu0 %v297
    %713 = vmatprep.subr.mxu0 %v315
    %714 = vmatpush1.msra.mxu0 %v314
    %715 = vmatprep.subr.mxu0 %v332
    %716 = vmatpush1.msra.mxu0 %v331
    %717 = vmatprep.subr.mxu0 %v349
    %718 = vmatpush1.msra.mxu0 %v348
    %719 = vmatprep.subr.mxu0 %v366
    %720 = vmatpush1.msra.mxu0 %v365
    %721 = vmatprep.subr.mxu0 %v383
    %722 = vmatpush1.msra.mxu0 %v382
    %723 = vmatprep.subr.mxu0 %v400
    %724 = vmatpush1.msra.mxu0 %v399
    %725 = vmatprep.subr.mxu0 %v417
    %726 = vmatpush1.msra.mxu0 %v416
    %727 = vmatprep.subr.mxu0 %v434
    %728 = vmatpush1.msra.mxu0 %v433
    %729 = vmatprep.subr.mxu0 %v451
    %730 = vmatpush1.msra.mxu0 %v450
    %731 = vmatprep.subr.mxu0 %v468
    %732 = vmatpush1.msra.mxu0 %v467
    %733 = vmatprep.subr.mxu0 %v485
    %734 = vmatpush1.msra.mxu0 %v484
    %735 = vmatprep.subr.mxu0 %v502
    %736 = vmatpush1.msra.mxu0 %v501
    %737 = vmatprep.subr.mxu0 %v519
    %738 = vmatpush1.msra.mxu0 %v518
    %739 = vmatprep.subr.mxu0 %v536
    %740 = vmatpush1.msra.mxu0 %v535
    %741 = vmatprep.subr.mxu0 %v553
    %742 = vmatpush1.msra.mxu0 %v552
    %743 = vmatprep.subr.mxu0 %v570
    %744 = vmatpush1.msra.mxu0 %v569
    %745 = vmatprep.subr.mxu0 %v587
    %746 = vmatpush1.msra.mxu0 %v586
    %747 = vmatprep.mubr.f32.mxu0 %v609
    %748 = vmatmul.mubr.f32.gmra.mrb[0].mxu0 %v608
    %v749 = vpop.f32.mrb[0].mxu0
    %v750 = vadd.f32 0.0, %v749
    %v751 = vpop.f32.mrb[0].mxu0
    %v752 = vadd.f32 0.0, %v751
    %753 = vdwg.mxu0
    %754 = vmatprep.subr.mxu0 %v62
    %755 = vmatpush1.msra.mxu0 %v61
    %756 = vmatprep.subr.mxu0 %v79
    %757 = vmatpush1.msra.mxu0 %v78
    %758 = vmatprep.subr.mxu0 %v96
    %759 = vmatpush1.msra.mxu0 %v95
    %760 = vmatprep.subr.mxu0 %v113
    %761 = vmatpush1.msra.mxu0 %v112
    %762 = vmatprep.subr.mxu0 %v130
    %763 = vmatpush1.msra.mxu0 %v129
    %764 = vmatprep.subr.mxu0 %v147
    %765 = vmatpush1.msra.mxu0 %v146
    %766 = vmatprep.subr.mxu0 %v164
    %767 = vmatpush1.msra.mxu0 %v163
    %768 = vmatprep.subr.mxu0 %v181
    %769 = vmatpush1.msra.mxu0 %v180
    %770 = vmatprep.subr.mxu0 %v198
    %771 = vmatpush1.msra.mxu0 %v197
    %772 = vmatprep.subr.mxu0 %v215
    %773 = vmatpush1.msra.mxu0 %v214
    %774 = vmatprep.subr.mxu0 %v232
    %775 = vmatpush1.msra.mxu0 %v231
    %776 = vmatprep.subr.mxu0 %v249
    %777 = vmatpush1.msra.mxu0 %v248
    %778 = vmatprep.subr.mxu0 %v266
    %779 = vmatpush1.msra.mxu0 %v265
    %780 = vmatprep.subr.mxu0 %v283
    %781 = vmatpush1.msra.mxu0 %v282
    %782 = vmatprep.subr.mxu0 %v300
    %783 = vmatpush1.msra.mxu0 %v299
    %784 = vmatprep.subr.mxu0 %v317
    %785 = vmatpush1.msra.mxu0 %v316
    %786 = vmatprep.subr.mxu0 %v334
    %787 = vmatpush1.msra.mxu0 %v333
    %788 = vmatprep.subr.mxu0 %v351
    %789 = vmatpush1.msra.mxu0 %v350
    %790 = vmatprep.subr.mxu0 %v368
    %791 = vmatpush1.msra.mxu0 %v367
    %792 = vmatprep.subr.mxu0 %v385
    %793 = vmatpush1.msra.mxu0 %v384
    %794 = vmatprep.subr.mxu0 %v402
    %795 = vmatpush1.msra.mxu0 %v401
    %796 = vmatprep.subr.mxu0 %v419
    %797 = vmatpush1.msra.mxu0 %v418
    %798 = vmatprep.subr.mxu0 %v436
    %799 = vmatpush1.msra.mxu0 %v435
    %800 = vmatprep.subr.mxu0 %v453
    %801 = vmatpush1.msra.mxu0 %v452
    %802 = vmatprep.subr.mxu0 %v470
    %803 = vmatpush1.msra.mxu0 %v469
    %804 = vmatprep.subr.mxu0 %v487
    %805 = vmatpush1.msra.mxu0 %v486
    %806 = vmatprep.subr.mxu0 %v504
    %807 = vmatpush1.msra.mxu0 %v503
    %808 = vmatprep.subr.mxu0 %v521
    %809 = vmatpush1.msra.mxu0 %v520
    %810 = vmatprep.subr.mxu0 %v538
    %811 = vmatpush1.msra.mxu0 %v537
    %812 = vmatprep.subr.mxu0 %v555
    %813 = vmatpush1.msra.mxu0 %v554
    %814 = vmatprep.subr.mxu0 %v572
    %815 = vmatpush1.msra.mxu0 %v571
    %816 = vmatprep.subr.mxu0 %v589
    %817 = vmatpush1.msra.mxu0 %v588
    %818 = vmatprep.mubr.f32.mxu0 %v609
    %819 = vmatmul.mubr.f32.gmra.mrb[0].mxu0 %v608
    %v820 = vpop.f32.mrb[0].mxu0
    %v821 = vadd.f32 0.0, %v820
    %v822 = vpop.f32.mrb[0].mxu0
    %v823 = vadd.f32 0.0, %v822
    %824 = vdwg.mxu0
    %825 = vmatprep.subr.mxu0 %v64
    %826 = vmatpush1.msra.mxu0 %v63
    %827 = vmatprep.subr.mxu0 %v81
    %828 = vmatpush1.msra.mxu0 %v80
    %829 = vmatprep.subr.mxu0 %v98
    %830 = vmatpush1.msra.mxu0 %v97
    %831 = vmatprep.subr.mxu0 %v115
    %832 = vmatpush1.msra.mxu0 %v114
    %833 = vmatprep.subr.mxu0 %v132
    %834 = vmatpush1.msra.mxu0 %v131
    %835 = vmatprep.subr.mxu0 %v149
    %836 = vmatpush1.msra.mxu0 %v148
    %837 = vmatprep.subr.mxu0 %v166
    %838 = vmatpush1.msra.mxu0 %v165
    %839 = vmatprep.subr.mxu0 %v183
    %840 = vmatpush1.msra.mxu0 %v182
    %841 = vmatprep.subr.mxu0 %v200
    %842 = vmatpush1.msra.mxu0 %v199
    %843 = vmatprep.subr.mxu0 %v217
    %844 = vmatpush1.msra.mxu0 %v216
    %845 = vmatprep.subr.mxu0 %v234
    %846 = vmatpush1.msra.mxu0 %v233
    %847 = vmatprep.subr.mxu0 %v251
    %848 = vmatpush1.msra.mxu0 %v250
    %849 = vmatprep.subr.mxu0 %v268
    %850 = vmatpush1.msra.mxu0 %v267
    %851 = vmatprep.subr.mxu0 %v285
    %852 = vmatpush1.msra.mxu0 %v284
    %853 = vmatprep.subr.mxu0 %v302
    %854 = vmatpush1.msra.mxu0 %v301
    %855 = vmatprep.subr.mxu0 %v319
    %856 = vmatpush1.msra.mxu0 %v318
    %857 = vmatprep.subr.mxu0 %v336
    %858 = vmatpush1.msra.mxu0 %v335
    %859 = vmatprep.subr.mxu0 %v353
    %860 = vmatpush1.msra.mxu0 %v352
    %861 = vmatprep.subr.mxu0 %v370
    %862 = vmatpush1.msra.mxu0 %v369
    %863 = vmatprep.subr.mxu0 %v387
    %864 = vmatpush1.msra.mxu0 %v386
    %865 = vmatprep.subr.mxu0 %v404
    %866 = vmatpush1.msra.mxu0 %v403
    %867 = vmatprep.subr.mxu0 %v421
    %868 = vmatpush1.msra.mxu0 %v420
    %869 = vmatprep.subr.mxu0 %v438
    %870 = vmatpush1.msra.mxu0 %v437
    %871 = vmatprep.subr.mxu0 %v455
    %872 = vmatpush1.msra.mxu0 %v454
    %873 = vmatprep.subr.mxu0 %v472
    %874 = vmatpush1.msra.mxu0 %v471
    %875 = vmatprep.subr.mxu0 %v489
    %876 = vmatpush1.msra.mxu0 %v488
    %877 = vmatprep.subr.mxu0 %v506
    %878 = vmatpush1.msra.mxu0 %v505
    %879 = vmatprep.subr.mxu0 %v523
    %880 = vmatpush1.msra.mxu0 %v522
    %881 = vmatprep.subr.mxu0 %v540
    %882 = vmatpush1.msra.mxu0 %v539
    %883 = vmatprep.subr.mxu0 %v557
    %884 = vmatpush1.msra.mxu0 %v556
    %885 = vmatprep.subr.mxu0 %v574
    %886 = vmatpush1.msra.mxu0 %v573
    %887 = vmatprep.subr.mxu0 %v591
    %888 = vmatpush1.msra.mxu0 %v590
    %889 = vmatprep.mubr.f32.mxu0 %v609
    %890 = vmatmul.mubr.f32.gmra.mrb[0].mxu0 %v608
    %v891 = vpop.f32.mrb[0].mxu0
    %v892 = vadd.f32 0.0, %v891
    %v893 = vpop.f32.mrb[0].mxu0
    %v894 = vadd.f32 0.0, %v893
    %895 = vdwg.mxu0
    %896 = vmatprep.subr.mxu0 %v66
    %897 = vmatpush1.msra.mxu0 %v65
    %898 = vmatprep.subr.mxu0 %v83
    %899 = vmatpush1.msra.mxu0 %v82
    %900 = vmatprep.subr.mxu0 %v100
    %901 = vmatpush1.msra.mxu0 %v99
    %902 = vmatprep.subr.mxu0 %v117
    %903 = vmatpush1.msra.mxu0 %v116
    %904 = vmatprep.subr.mxu0 %v134
    %905 = vmatpush1.msra.mxu0 %v133
    %906 = vmatprep.subr.mxu0 %v151
    %907 = vmatpush1.msra.mxu0 %v150
    %908 = vmatprep.subr.mxu0 %v168
    %909 = vmatpush1.msra.mxu0 %v167
    %910 = vmatprep.subr.mxu0 %v185
    %911 = vmatpush1.msra.mxu0 %v184
    %912 = vmatprep.subr.mxu0 %v202
    %913 = vmatpush1.msra.mxu0 %v201
    %914 = vmatprep.subr.mxu0 %v219
    %915 = vmatpush1.msra.mxu0 %v218
    %916 = vmatprep.subr.mxu0 %v236
    %917 = vmatpush1.msra.mxu0 %v235
    %918 = vmatprep.subr.mxu0 %v253
    %919 = vmatpush1.msra.mxu0 %v252
    %920 = vmatprep.subr.mxu0 %v270
    %921 = vmatpush1.msra.mxu0 %v269
    %922 = vmatprep.subr.mxu0 %v287
    %923 = vmatpush1.msra.mxu0 %v286
    %924 = vmatprep.subr.mxu0 %v304
    %925 = vmatpush1.msra.mxu0 %v303
    %926 = vmatprep.subr.mxu0 %v321
    %927 = vmatpush1.msra.mxu0 %v320
    %928 = vmatprep.subr.mxu0 %v338
    %929 = vmatpush1.msra.mxu0 %v337
    %930 = vmatprep.subr.mxu0 %v355
    %931 = vmatpush1.msra.mxu0 %v354
    %932 = vmatprep.subr.mxu0 %v372
    %933 = vmatpush1.msra.mxu0 %v371
    %934 = vmatprep.subr.mxu0 %v389
    %935 = vmatpush1.msra.mxu0 %v388
    %936 = vmatprep.subr.mxu0 %v406
    %937 = vmatpush1.msra.mxu0 %v405
    %938 = vmatprep.subr.mxu0 %v423
    %939 = vmatpush1.msra.mxu0 %v422
    %940 = vmatprep.subr.mxu0 %v440
    %941 = vmatpush1.msra.mxu0 %v439
    %942 = vmatprep.subr.mxu0 %v457
    %943 = vmatpush1.msra.mxu0 %v456
    %944 = vmatprep.subr.mxu0 %v474
    %945 = vmatpush1.msra.mxu0 %v473
    %946 = vmatprep.subr.mxu0 %v491
    %947 = vmatpush1.msra.mxu0 %v490
    %948 = vmatprep.subr.mxu0 %v508
    %949 = vmatpush1.msra.mxu0 %v507
    %950 = vmatprep.subr.mxu0 %v525
    %951 = vmatpush1.msra.mxu0 %v524
    %952 = vmatprep.subr.mxu0 %v542
    %953 = vmatpush1.msra.mxu0 %v541
    %954 = vmatprep.subr.mxu0 %v559
    %955 = vmatpush1.msra.mxu0 %v558
    %956 = vmatprep.subr.mxu0 %v576
    %957 = vmatpush1.msra.mxu0 %v575
    %958 = vmatprep.subr.mxu0 %v593
    %959 = vmatpush1.msra.mxu0 %v592
    %960 = vmatprep.mubr.f32.mxu0 %v609
    %961 = vmatmul.mubr.f32.gmra.mrb[0].mxu0 %v608
    %v962 = vpop.f32.mrb[0].mxu0
    %v963 = vadd.f32 0.0, %v962
    %v964 = vpop.f32.mrb[0].mxu0
    %v965 = vadd.f32 0.0, %v964
    %966 = vdwg.mxu0
    %967 = vmatprep.subr.mxu0 %v68
    %968 = vmatpush1.msra.mxu0 %v67
    %969 = vmatprep.subr.mxu0 %v85
    %970 = vmatpush1.msra.mxu0 %v84
    %971 = vmatprep.subr.mxu0 %v102
    %972 = vmatpush1.msra.mxu0 %v101
    %973 = vmatprep.subr.mxu0 %v119
    %974 = vmatpush1.msra.mxu0 %v118
    %975 = vmatprep.subr.mxu0 %v136
    %976 = vmatpush1.msra.mxu0 %v135
    %977 = vmatprep.subr.mxu0 %v153
    %978 = vmatpush1.msra.mxu0 %v152
    %979 = vmatprep.subr.mxu0 %v170
    %980 = vmatpush1.msra.mxu0 %v169
    %981 = vmatprep.subr.mxu0 %v187
    %982 = vmatpush1.msra.mxu0 %v186
    %983 = vmatprep.subr.mxu0 %v204
    %984 = vmatpush1.msra.mxu0 %v203
    %985 = vmatprep.subr.mxu0 %v221
    %986 = vmatpush1.msra.mxu0 %v220
    %987 = vmatprep.subr.mxu0 %v238
    %988 = vmatpush1.msra.mxu0 %v237
    %989 = vmatprep.subr.mxu0 %v255
    %990 = vmatpush1.msra.mxu0 %v254
    %991 = vmatprep.subr.mxu0 %v272
    %992 = vmatpush1.msra.mxu0 %v271
    %993 = vmatprep.subr.mxu0 %v289
    %994 = vmatpush1.msra.mxu0 %v288
    %995 = vmatprep.subr.mxu0 %v306
    %996 = vmatpush1.msra.mxu0 %v305
    %997 = vmatprep.subr.mxu0 %v323
    %998 = vmatpush1.msra.mxu0 %v322
    %999 = vmatprep.subr.mxu0 %v340
    %1000 = vmatpush1.msra.mxu0 %v339
    %1001 = vmatprep.subr.mxu0 %v357
    %1002 = vmatpush1.msra.mxu0 %v356
    %1003 = vmatprep.subr.mxu0 %v374
    %1004 = vmatpush1.msra.mxu0 %v373
    %1005 = vmatprep.subr.mxu0 %v391
    %1006 = vmatpush1.msra.mxu0 %v390
    %1007 = vmatprep.subr.mxu0 %v408
    %1008 = vmatpush1.msra.mxu0 %v407
    %1009 = vmatprep.subr.mxu0 %v425
    %1010 = vmatpush1.msra.mxu0 %v424
    %1011 = vmatprep.subr.mxu0 %v442
    %1012 = vmatpush1.msra.mxu0 %v441
    %1013 = vmatprep.subr.mxu0 %v459
    %1014 = vmatpush1.msra.mxu0 %v458
    %1015 = vmatprep.subr.mxu0 %v476
    %1016 = vmatpush1.msra.mxu0 %v475
    %1017 = vmatprep.subr.mxu0 %v493
    %1018 = vmatpush1.msra.mxu0 %v492
    %1019 = vmatprep.subr.mxu0 %v510
    %1020 = vmatpush1.msra.mxu0 %v509
    %1021 = vmatprep.subr.mxu0 %v527
    %1022 = vmatpush1.msra.mxu0 %v526
    %1023 = vmatprep.subr.mxu0 %v544
    %1024 = vmatpush1.msra.mxu0 %v543
    %1025 = vmatprep.subr.mxu0 %v561
    %1026 = vmatpush1.msra.mxu0 %v560
    %1027 = vmatprep.subr.mxu0 %v578
    %1028 = vmatpush1.msra.mxu0 %v577
    %1029 = vmatprep.subr.mxu0 %v595
    %1030 = vmatpush1.msra.mxu0 %v594
    %1031 = vmatprep.mubr.f32.mxu0 %v609
    %1032 = vmatmul.mubr.f32.gmra.mrb[0].mxu0 %v608
    %v1033 = vpop.f32.mrb[0].mxu0
    %v1034 = vadd.f32 0.0, %v1033
    %v1035 = vpop.f32.mrb[0].mxu0
    %v1036 = vadd.f32 0.0, %v1035
    %1037 = vdwg.mxu0
    %1038 = vmatprep.subr.mxu0 %v70
    %1039 = vmatpush1.msra.mxu0 %v69
    %1040 = vmatprep.subr.mxu0 %v87
    %1041 = vmatpush1.msra.mxu0 %v86
    %1042 = vmatprep.subr.mxu0 %v104
    %1043 = vmatpush1.msra.mxu0 %v103
    %1044 = vmatprep.subr.mxu0 %v121
    %1045 = vmatpush1.msra.mxu0 %v120
    %1046 = vmatprep.subr.mxu0 %v138
    %1047 = vmatpush1.msra.mxu0 %v137
    %1048 = vmatprep.subr.mxu0 %v155
    %1049 = vmatpush1.msra.mxu0 %v154
    %1050 = vmatprep.subr.mxu0 %v172
    %1051 = vmatpush1.msra.mxu0 %v171
    %1052 = vmatprep.subr.mxu0 %v189
    %1053 = vmatpush1.msra.mxu0 %v188
    %1054 = vmatprep.subr.mxu0 %v206
    %1055 = vmatpush1.msra.mxu0 %v205
    %1056 = vmatprep.subr.mxu0 %v223
    %1057 = vmatpush1.msra.mxu0 %v222
    %1058 = vmatprep.subr.mxu0 %v240
    %1059 = vmatpush1.msra.mxu0 %v239
    %1060 = vmatprep.subr.mxu0 %v257
    %1061 = vmatpush1.msra.mxu0 %v256
    %1062 = vmatprep.subr.mxu0 %v274
    %1063 = vmatpush1.msra.mxu0 %v273
    %1064 = vmatprep.subr.mxu0 %v291
    %1065 = vmatpush1.msra.mxu0 %v290
    %1066 = vmatprep.subr.mxu0 %v308
    %1067 = vmatpush1.msra.mxu0 %v307
    %1068 = vmatprep.subr.mxu0 %v325
    %1069 = vmatpush1.msra.mxu0 %v324
    %1070 = vmatprep.subr.mxu0 %v342
    %1071 = vmatpush1.msra.mxu0 %v341
    %1072 = vmatprep.subr.mxu0 %v359
    %1073 = vmatpush1.msra.mxu0 %v358
    %1074 = vmatprep.subr.mxu0 %v376
    %1075 = vmatpush1.msra.mxu0 %v375
    %1076 = vmatprep.subr.mxu0 %v393
    %1077 = vmatpush1.msra.mxu0 %v392
    %1078 = vmatprep.subr.mxu0 %v410
    %1079 = vmatpush1.msra.mxu0 %v409
    %1080 = vmatprep.subr.mxu0 %v427
    %1081 = vmatpush1.msra.mxu0 %v426
    %1082 = vmatprep.subr.mxu0 %v444
    %1083 = vmatpush1.msra.mxu0 %v443
    %1084 = vmatprep.subr.mxu0 %v461
    %1085 = vmatpush1.msra.mxu0 %v460
    %1086 = vmatprep.subr.mxu0 %v478
    %1087 = vmatpush1.msra.mxu0 %v477
    %1088 = vmatprep.subr.mxu0 %v495
    %1089 = vmatpush1.msra.mxu0 %v494
    %1090 = vmatprep.subr.mxu0 %v512
    %1091 = vmatpush1.msra.mxu0 %v511
    %1092 = vmatprep.subr.mxu0 %v529
    %1093 = vmatpush1.msra.mxu0 %v528
    %1094 = vmatprep.subr.mxu0 %v546
    %1095 = vmatpush1.msra.mxu0 %v545
    %1096 = vmatprep.subr.mxu0 %v563
    %1097 = vmatpush1.msra.mxu0 %v562
    %1098 = vmatprep.subr.mxu0 %v580
    %1099 = vmatpush1.msra.mxu0 %v579
    %1100 = vmatprep.subr.mxu0 %v597
    %1101 = vmatpush1.msra.mxu0 %v596
    %1102 = vmatprep.mubr.f32.mxu0 %v609
    %1103 = vmatmul.mubr.f32.gmra.mrb[0].mxu0 %v608
    %v1104 = vpop.f32.mrb[0].mxu0
    %v1105 = vadd.f32 0.0, %v1104
    %v1106 = vpop.f32.mrb[0].mxu0
    %v1107 = vadd.f32 0.0, %v1106
    %1108 = vdwg.mxu0
    %1109 = vmatprep.subr.mxu0 %v72
    %1110 = vmatpush1.msra.mxu0 %v71
    %1111 = vmatprep.subr.mxu0 %v89
    %1112 = vmatpush1.msra.mxu0 %v88
    %1113 = vmatprep.subr.mxu0 %v106
    %1114 = vmatpush1.msra.mxu0 %v105
    %1115 = vmatprep.subr.mxu0 %v123
    %1116 = vmatpush1.msra.mxu0 %v122
    %1117 = vmatprep.subr.mxu0 %v140
    %1118 = vmatpush1.msra.mxu0 %v139
    %1119 = vmatprep.subr.mxu0 %v157
    %1120 = vmatpush1.msra.mxu0 %v156
    %1121 = vmatprep.subr.mxu0 %v174
    %1122 = vmatpush1.msra.mxu0 %v173
    %1123 = vmatprep.subr.mxu0 %v191
    %1124 = vmatpush1.msra.mxu0 %v190
    %1125 = vmatprep.subr.mxu0 %v208
    %1126 = vmatpush1.msra.mxu0 %v207
    %1127 = vmatprep.subr.mxu0 %v225
    %1128 = vmatpush1.msra.mxu0 %v224
    %1129 = vmatprep.subr.mxu0 %v242
    %1130 = vmatpush1.msra.mxu0 %v241
    %1131 = vmatprep.subr.mxu0 %v259
    %1132 = vmatpush1.msra.mxu0 %v258
    %1133 = vmatprep.subr.mxu0 %v276
    %1134 = vmatpush1.msra.mxu0 %v275
    %1135 = vmatprep.subr.mxu0 %v293
    %1136 = vmatpush1.msra.mxu0 %v292
    %1137 = vmatprep.subr.mxu0 %v310
    %1138 = vmatpush1.msra.mxu0 %v309
    %1139 = vmatprep.subr.mxu0 %v327
    %1140 = vmatpush1.msra.mxu0 %v326
    %1141 = vmatprep.subr.mxu0 %v344
    %1142 = vmatpush1.msra.mxu0 %v343
    %1143 = vmatprep.subr.mxu0 %v361
    %1144 = vmatpush1.msra.mxu0 %v360
    %1145 = vmatprep.subr.mxu0 %v378
    %1146 = vmatpush1.msra.mxu0 %v377
    %1147 = vmatprep.subr.mxu0 %v395
    %1148 = vmatpush1.msra.mxu0 %v394
    %1149 = vmatprep.subr.mxu0 %v412
    %1150 = vmatpush1.msra.mxu0 %v411
    %1151 = vmatprep.subr.mxu0 %v429
    %1152 = vmatpush1.msra.mxu0 %v428
    %1153 = vmatprep.subr.mxu0 %v446
    %1154 = vmatpush1.msra.mxu0 %v445
    %1155 = vmatprep.subr.mxu0 %v463
    %1156 = vmatpush1.msra.mxu0 %v462
    %1157 = vmatprep.subr.mxu0 %v480
    %1158 = vmatpush1.msra.mxu0 %v479
    %1159 = vmatprep.subr.mxu0 %v497
    %1160 = vmatpush1.msra.mxu0 %v496
    %1161 = vmatprep.subr.mxu0 %v514
    %1162 = vmatpush1.msra.mxu0 %v513
    %1163 = vmatprep.subr.mxu0 %v531
    %1164 = vmatpush1.msra.mxu0 %v530
    %1165 = vmatprep.subr.mxu0 %v548
    %1166 = vmatpush1.msra.mxu0 %v547
    %1167 = vmatprep.subr.mxu0 %v565
    %1168 = vmatpush1.msra.mxu0 %v564
    %1169 = vmatprep.subr.mxu0 %v582
    %1170 = vmatpush1.msra.mxu0 %v581
    %1171 = vmatprep.subr.mxu0 %v599
    %1172 = vmatpush1.msra.mxu0 %v598
    %1173 = vmatprep.mubr.f32.mxu0 %v609
    %1174 = vmatmul.mubr.f32.gmra.mrb[0].mxu0 %v608
    %v1175 = vpop.f32.mrb[0].mxu0
    %v1176 = vadd.f32 0.0, %v1175
    %v1177 = vpop.f32.mrb[0].mxu0
    %v1178 = vadd.f32 0.0, %v1177
    %1179 = vdwg.mxu0
    %1180 = vmatprep.subr.mxu0 0.0
    %1181 = vmatpush1.msra.mxu0 %v73
    %1182 = vmatprep.subr.mxu0 0.0
    %1183 = vmatpush1.msra.mxu0 %v90
    %1184 = vmatprep.subr.mxu0 0.0
    %1185 = vmatpush1.msra.mxu0 %v107
    %1186 = vmatprep.subr.mxu0 0.0
    %1187 = vmatpush1.msra.mxu0 %v124
    %1188 = vmatprep.subr.mxu0 0.0
    %1189 = vmatpush1.msra.mxu0 %v141
    %1190 = vmatprep.subr.mxu0 0.0
    %1191 = vmatpush1.msra.mxu0 %v158
    %1192 = vmatprep.subr.mxu0 0.0
    %1193 = vmatpush1.msra.mxu0 %v175
    %1194 = vmatprep.subr.mxu0 0.0
    %1195 = vmatpush1.msra.mxu0 %v192
    %1196 = vmatprep.subr.mxu0 0.0
    %1197 = vmatpush1.msra.mxu0 %v209
    %1198 = vmatprep.subr.mxu0 0.0
    %1199 = vmatpush1.msra.mxu0 %v226
    %1200 = vmatprep.subr.mxu0 0.0
    %1201 = vmatpush1.msra.mxu0 %v243
    %1202 = vmatprep.subr.mxu0 0.0
    %1203 = vmatpush1.msra.mxu0 %v260
    %1204 = vmatprep.subr.mxu0 0.0
    %1205 = vmatpush1.msra.mxu0 %v277
    %1206 = vmatprep.subr.mxu0 0.0
    %1207 = vmatpush1.msra.mxu0 %v294
    %1208 = vmatprep.subr.mxu0 0.0
    %1209 = vmatpush1.msra.mxu0 %v311
    %1210 = vmatprep.subr.mxu0 0.0
    %1211 = vmatpush1.msra.mxu0 %v328
    %1212 = vmatprep.subr.mxu0 0.0
    %1213 = vmatpush1.msra.mxu0 %v345
    %1214 = vmatprep.subr.mxu0 0.0
    %1215 = vmatpush1.msra.mxu0 %v362
    %1216 = vmatprep.subr.mxu0 0.0
    %1217 = vmatpush1.msra.mxu0 %v379
    %1218 = vmatprep.subr.mxu0 0.0
    %1219 = vmatpush1.msra.mxu0 %v396
    %1220 = vmatprep.subr.mxu0 0.0
    %1221 = vmatpush1.msra.mxu0 %v413
    %1222 = vmatprep.subr.mxu0 0.0
    %1223 = vmatpush1.msra.mxu0 %v430
    %1224 = vmatprep.subr.mxu0 0.0
    %1225 = vmatpush1.msra.mxu0 %v447
    %1226 = vmatprep.subr.mxu0 0.0
    %1227 = vmatpush1.msra.mxu0 %v464
    %1228 = vmatprep.subr.mxu0 0.0
    %1229 = vmatpush1.msra.mxu0 %v481
    %1230 = vmatprep.subr.mxu0 0.0
    %1231 = vmatpush1.msra.mxu0 %v498
    %1232 = vmatprep.subr.mxu0 0.0
    %1233 = vmatpush1.msra.mxu0 %v515
    %1234 = vmatprep.subr.mxu0 0.0
    %1235 = vmatpush1.msra.mxu0 %v532
    %1236 = vmatprep.subr.mxu0 0.0
    %1237 = vmatpush1.msra.mxu0 %v549
    %1238 = vmatprep.subr.mxu0 0.0
    %1239 = vmatpush1.msra.mxu0 %v566
    %1240 = vmatprep.subr.mxu0 0.0
    %1241 = vmatpush1.msra.mxu0 %v583
    %1242 = vmatprep.subr.mxu0 0.0
    %1243 = vmatpush1.msra.mxu0 %v600
    %1244 = vmatprep.mubr.f32.mxu0 %v609
    %1245 = vmatmul.mubr.f32.gmra.mrb[0].mxu0 %v608
    %v1246 = vpop.f32.mrb[0].mxu0
    %v1247 = vadd.f32 0.0, %v1246
    %v1248 = vpop.f32.mrb[0].mxu0
    %1249 = vdwg.mxu0
    %v1250 = vld [vmem:[#allocation7] sm:$0xff]
    %v1251 = vld [vmem:[#allocation7 + $0x8] sm:$0xff]
    %v1252 = vld [vmem:[#allocation7 + $0x10] sm:$0xff]
    %v1253 = vld [vmem:[#allocation7 + $0x18] sm:$0xff]
    %v1254 = vld [vmem:[#allocation7 + $0x20] sm:$0xff]
    %v1255 = vld [vmem:[#allocation7 + $0x28] sm:$0xff]
    %v1256 = vld [vmem:[#allocation7 + $0x30] sm:$0xff]
    %v1257 = vld [vmem:[#allocation7 + $0x38] sm:$0xff]
    %v1258 = vld [vmem:[#allocation7 + $0x40] sm:$0xff]
    %v1259 = vld [vmem:[#allocation7 + $0x48] sm:$0xff]
    %v1260 = vld [vmem:[#allocation7 + $0x50] sm:$0xff]
    %v1261 = vld [vmem:[#allocation7 + $0x58] sm:$0xff]
    %v1262 = vld [vmem:[#allocation7 + $0x60] sm:$0xff]
    %v1263 = vld [vmem:[#allocation7 + $0x68] sm:$0xff]
    %v1264 = vld [vmem:[#allocation7 + $0x70] sm:$0xff]
    %v1265 = vld [vmem:[#allocation7 + $0x78] sm:$0xff]
    %v1266 = vld [vmem:[#allocation7 + $0x80] sm:$0xff]
    %v1267 = vld [vmem:[#allocation7 + $0x88] sm:$0xff]
    %v1268 = vld [vmem:[#allocation7 + $0x90] sm:$0xff]
    %v1269 = vld [vmem:[#allocation7 + $0x98] sm:$0xff]
    %v1270 = vld [vmem:[#allocation7 + $0xa0] sm:$0xff]
    %v1271 = vld [vmem:[#allocation7 + $0xa8] sm:$0xff]
    %v1272 = vld [vmem:[#allocation7 + $0xb0] sm:$0xff]
    %v1273 = vld [vmem:[#allocation7 + $0xb8] sm:$0xff]
    %v1274 = vld [vmem:[#allocation7 + $0xc0] sm:$0xff]
    %v1275 = vld [vmem:[#allocation7 + $0xc8] sm:$0xff]
    %v1276 = vld [vmem:[#allocation7 + $0xd0] sm:$0xff]
    %v1277 = vld [vmem:[#allocation7 + $0xd8] sm:$0xff]
    %v1278 = vld [vmem:[#allocation7 + $0xe0] sm:$0xff]
    %v1279 = vld [vmem:[#allocation7 + $0xe8] sm:$0xff]
    %v1280 = vld [vmem:[#allocation7 + $0xf0] sm:$0xff]
    %v1281 = vld [vmem:[#allocation7 + $0xf8] sm:$0xff]
    %v1282 = vld [vmem:[#allocation7 + $0x100] sm:$0xff]
    %v1283 = vld [vmem:[#allocation7 + $0x108] sm:$0xff]
    %v1284 = vld [vmem:[#allocation7 + $0x110] sm:$0xff]
    %v1285 = vld [vmem:[#allocation7 + $0x118] sm:$0xff]
    %v1286 = vld [vmem:[#allocation7 + $0x120] sm:$0xff]
    %v1287 = vld [vmem:[#allocation7 + $0x128] sm:$0xff]
    %v1288 = vld [vmem:[#allocation7 + $0x130] sm:$0xff]
    %v1289 = vld [vmem:[#allocation7 + $0x138] sm:$0xff]
    %v1290 = vld [vmem:[#allocation7 + $0x140] sm:$0xff]
    %v1291 = vld [vmem:[#allocation7 + $0x148] sm:$0xff]
    %v1292 = vld [vmem:[#allocation7 + $0x150] sm:$0xff]
    %v1293 = vld [vmem:[#allocation7 + $0x158] sm:$0xff]
    %v1294 = vld [vmem:[#allocation7 + $0x160] sm:$0xff]
    %v1295 = vld [vmem:[#allocation7 + $0x168] sm:$0xff]
    %v1296 = vld [vmem:[#allocation7 + $0x170] sm:$0xff]
    %v1297 = vld [vmem:[#allocation7 + $0x178] sm:$0xff]
    %v1298 = vld [vmem:[#allocation7 + $0x180] sm:$0xff]
    %v1299 = vld [vmem:[#allocation7 + $0x188] sm:$0xff]
    %v1300 = vld [vmem:[#allocation7 + $0x190] sm:$0xff]
    %v1301 = vld [vmem:[#allocation7 + $0x198] sm:$0xff]
    %v1302 = vld [vmem:[#allocation7 + $0x1a0] sm:$0xff]
    %v1303 = vld [vmem:[#allocation7 + $0x1a8] sm:$0xff]
    %v1304 = vld [vmem:[#allocation7 + $0x1b0] sm:$0xff]
    %v1305 = vld [vmem:[#allocation7 + $0x1b8] sm:$0xff]
    %v1306 = vld [vmem:[#allocation7 + $0x1c0] sm:$0xff]
    %v1307 = vld [vmem:[#allocation7 + $0x1c8] sm:$0xff]
    %v1308 = vld [vmem:[#allocation7 + $0x1d0] sm:$0xff]
    %v1309 = vld [vmem:[#allocation7 + $0x1d8] sm:$0xff]
    %v1310 = vld [vmem:[#allocation7 + $0x1e0] sm:$0xff]
    %v1311 = vld [vmem:[#allocation7 + $0x1e8] sm:$0xff]
    %v1312 = vld [vmem:[#allocation7 + $0x1f0] sm:$0xff]
    %v1313 = vld [vmem:[#allocation7 + $0x1f8] sm:$0xff]
    %v1314 = vld [vmem:[#allocation7 + $0x200] sm:$0xff]
    %v1315 = vld [vmem:[#allocation7 + $0x208] sm:$0xff]
    %v1316 = vld [vmem:[#allocation7 + $0x210] sm:$0xff]
    %v1317 = vld [vmem:[#allocation7 + $0x218] sm:$0xff]
    %v1318 = vld [vmem:[#allocation7 + $0x220] sm:$0xff]
    %v1319 = vld [vmem:[#allocation7 + $0x228] sm:$0xff]
    %v1320 = vld [vmem:[#allocation7 + $0x230] sm:$0xff]
    %v1321 = vld [vmem:[#allocation7 + $0x238] sm:$0xff]
    %v1322 = vld [vmem:[#allocation7 + $0x240] sm:$0xff]
    %v1323 = vld [vmem:[#allocation7 + $0x248] sm:$0xff]
    %v1324 = vld [vmem:[#allocation7 + $0x250] sm:$0xff]
    %v1325 = vld [vmem:[#allocation7 + $0x258] sm:$0xff]
    %v1326 = vld [vmem:[#allocation7 + $0x260] sm:$0xff]
    %v1327 = vld [vmem:[#allocation7 + $0x268] sm:$0xff]
    %v1328 = vld [vmem:[#allocation7 + $0x270] sm:$0xff]
    %v1329 = vld [vmem:[#allocation7 + $0x278] sm:$0xff]
    %v1330 = vld [vmem:[#allocation7 + $0x280] sm:$0xff]
    %v1331 = vld [vmem:[#allocation7 + $0x288] sm:$0xff]
    %v1332 = vld [vmem:[#allocation7 + $0x290] sm:$0xff]
    %v1333 = vld [vmem:[#allocation7 + $0x298] sm:$0xff]
    %v1334 = vld [vmem:[#allocation7 + $0x2a0] sm:$0xff]
    %v1335 = vld [vmem:[#allocation7 + $0x2a8] sm:$0xff]
    %v1336 = vld [vmem:[#allocation7 + $0x2b0] sm:$0xff]
    %v1337 = vld [vmem:[#allocation7 + $0x2b8] sm:$0xff]
    %v1338 = vld [vmem:[#allocation7 + $0x2c0] sm:$0xff]
    %v1339 = vld [vmem:[#allocation7 + $0x2c8] sm:$0xff]
    %v1340 = vld [vmem:[#allocation7 + $0x2d0] sm:$0xff]
    %v1341 = vld [vmem:[#allocation7 + $0x2d8] sm:$0xff]
    %v1342 = vld [vmem:[#allocation7 + $0x2e0] sm:$0xff]
    %v1343 = vld [vmem:[#allocation7 + $0x2e8] sm:$0xff]
    %v1344 = vld [vmem:[#allocation7 + $0x2f0] sm:$0xff]
    %v1345 = vld [vmem:[#allocation7 + $0x2f8] sm:$0xff]
    %v1346 = vld [vmem:[#allocation7 + $0x300] sm:$0xff]
    %v1347 = vld [vmem:[#allocation7 + $0x308] sm:$0xff]
    %v1348 = vld [vmem:[#allocation7 + $0x310] sm:$0xff]
    %v1349 = vld [vmem:[#allocation7 + $0x318] sm:$0xff]
    %v1350 = vld [vmem:[#allocation7 + $0x320] sm:$0xff]
    %v1351 = vld [vmem:[#allocation7 + $0x328] sm:$0xff]
    %v1352 = vld [vmem:[#allocation7 + $0x330] sm:$0xff]
    %v1353 = vld [vmem:[#allocation7 + $0x338] sm:$0xff]
    %v1354 = vld [vmem:[#allocation7 + $0x340] sm:$0xff]
    %v1355 = vld [vmem:[#allocation7 + $0x348] sm:$0xff]
    %v1356 = vld [vmem:[#allocation7 + $0x350] sm:$0xff]
    %v1357 = vld [vmem:[#allocation7 + $0x358] sm:$0xff]
    %v1358 = vld [vmem:[#allocation7 + $0x360] sm:$0xff]
    %v1359 = vld [vmem:[#allocation7 + $0x368] sm:$0xff]
    %v1360 = vld [vmem:[#allocation7 + $0x370] sm:$0xff]
    %v1361 = vld [vmem:[#allocation7 + $0x378] sm:$0xff]
    %v1362 = vld [vmem:[#allocation7 + $0x380] sm:$0xff]
    %v1363 = vld [vmem:[#allocation7 + $0x388] sm:$0xff]
    %v1364 = vld [vmem:[#allocation7 + $0x390] sm:$0xff]
    %v1365 = vld [vmem:[#allocation7 + $0x398] sm:$0xff]
    %v1366 = vld [vmem:[#allocation7 + $0x3a0] sm:$0xff]
    %v1367 = vld [vmem:[#allocation7 + $0x3a8] sm:$0xff]
    %v1368 = vld [vmem:[#allocation7 + $0x3b0] sm:$0xff]
    %v1369 = vld [vmem:[#allocation7 + $0x3b8] sm:$0xff]
    %v1370 = vld [vmem:[#allocation7 + $0x3c0] sm:$0xff]
    %v1371 = vld [vmem:[#allocation7 + $0x3c8] sm:$0xff]
    %v1372 = vld [vmem:[#allocation7 + $0x3d0] sm:$0xff]
    %v1373 = vld [vmem:[#allocation7 + $0x3d8] sm:$0xff]
    %v1374 = vld [vmem:[#allocation7 + $0x3e0] sm:$0xff]
    %v1375 = vld [vmem:[#allocation7 + $0x3e8] sm:$0xff]
    %v1376 = vld [vmem:[#allocation7 + $0x3f0] sm:$0xff]
    %v1377 = vld [vmem:[#allocation7 + $0x3f8] sm:$0xff]
    %v1378 = vld [vmem:[#allocation7 + $0x400] sm:$0xff]
    %v1379 = vld [vmem:[#allocation7 + $0x408] sm:$0xff]
    %v1380 = vld [vmem:[#allocation7 + $0x410] sm:$0xff]
    %v1381 = vld [vmem:[#allocation7 + $0x418] sm:$0xff]
    %v1382 = vld [vmem:[#allocation7 + $0x420] sm:$0xff]
    %v1383 = vld [vmem:[#allocation7 + $0x428] sm:$0xff]
    %v1384 = vld [vmem:[#allocation7 + $0x430] sm:$0xff]
    %v1385 = vld [vmem:[#allocation7 + $0x438] sm:$0xff]
    %v1386 = vld [vmem:[#allocation7 + $0x440] sm:$0xff]
    %v1387 = vld [vmem:[#allocation7 + $0x448] sm:$0xff]
    %v1388 = vld [vmem:[#allocation7 + $0x450] sm:$0xff]
    %v1389 = vld [vmem:[#allocation7 + $0x458] sm:$0xff]
    %v1390 = vld [vmem:[#allocation7 + $0x460] sm:$0xff]
    %v1391 = vld [vmem:[#allocation7 + $0x468] sm:$0xff]
    %v1392 = vld [vmem:[#allocation7 + $0x470] sm:$0xff]
    %v1393 = vld [vmem:[#allocation7 + $0x478] sm:$0xff]
    %v1394 = vld [vmem:[#allocation7 + $0x480] sm:$0xff]
    %v1395 = vld [vmem:[#allocation7 + $0x488] sm:$0xff]
    %v1396 = vld [vmem:[#allocation7 + $0x490] sm:$0xff]
    %v1397 = vld [vmem:[#allocation7 + $0x498] sm:$0xff]
    %v1398 = vld [vmem:[#allocation7 + $0x4a0] sm:$0xff]
    %v1399 = vld [vmem:[#allocation7 + $0x4a8] sm:$0xff]
    %v1400 = vld [vmem:[#allocation7 + $0x4b0] sm:$0xff]
    %v1401 = vld [vmem:[#allocation7 + $0x4b8] sm:$0xff]
    %v1402 = vld [vmem:[#allocation7 + $0x4c0] sm:$0xff]
    %v1403 = vld [vmem:[#allocation7 + $0x4c8] sm:$0xff]
    %v1404 = vld [vmem:[#allocation7 + $0x4d0] sm:$0xff]
    %v1405 = vld [vmem:[#allocation7 + $0x4d8] sm:$0xff]
    %v1406 = vld [vmem:[#allocation7 + $0x4e0] sm:$0xff]
    %v1407 = vld [vmem:[#allocation7 + $0x4e8] sm:$0xff]
    %v1408 = vld [vmem:[#allocation7 + $0x4f0] sm:$0xff]
    %v1409 = vld [vmem:[#allocation7 + $0x4f8] sm:$0xff]
    %v1410 = vld [vmem:[#allocation7 + $0x500] sm:$0xff]
    %v1411 = vld [vmem:[#allocation7 + $0x508] sm:$0xff]
    %v1412 = vld [vmem:[#allocation7 + $0x510] sm:$0xff]
    %v1413 = vld [vmem:[#allocation7 + $0x518] sm:$0xff]
    %v1414 = vld [vmem:[#allocation7 + $0x520] sm:$0xff]
    %v1415 = vld [vmem:[#allocation7 + $0x528] sm:$0xff]
    %v1416 = vld [vmem:[#allocation7 + $0x530] sm:$0xff]
    %v1417 = vld [vmem:[#allocation7 + $0x538] sm:$0xff]
    %v1418 = vld [vmem:[#allocation7 + $0x540] sm:$0xff]
    %v1419 = vld [vmem:[#allocation7 + $0x548] sm:$0xff]
    %v1420 = vld [vmem:[#allocation7 + $0x550] sm:$0xff]
    %v1421 = vld [vmem:[#allocation7 + $0x558] sm:$0xff]
    %v1422 = vld [vmem:[#allocation7 + $0x560] sm:$0xff]
    %v1423 = vld [vmem:[#allocation7 + $0x568] sm:$0xff]
    %v1424 = vld [vmem:[#allocation7 + $0x570] sm:$0xff]
    %v1425 = vld [vmem:[#allocation7 + $0x578] sm:$0xff]
    %v1426 = vld [vmem:[#allocation7 + $0x580] sm:$0xff]
    %v1427 = vld [vmem:[#allocation7 + $0x588] sm:$0xff]
    %v1428 = vld [vmem:[#allocation7 + $0x590] sm:$0xff]
    %v1429 = vld [vmem:[#allocation7 + $0x598] sm:$0xff]
    %v1430 = vld [vmem:[#allocation7 + $0x5a0] sm:$0xff]
    %v1431 = vld [vmem:[#allocation7 + $0x5a8] sm:$0xff]
    %v1432 = vld [vmem:[#allocation7 + $0x5b0] sm:$0xff]
    %v1433 = vld [vmem:[#allocation7 + $0x5b8] sm:$0xff]
    %v1434 = vld [vmem:[#allocation7 + $0x5c0] sm:$0xff]
    %v1435 = vld [vmem:[#allocation7 + $0x5c8] sm:$0xff]
    %v1436 = vld [vmem:[#allocation7 + $0x5d0] sm:$0xff]
    %v1437 = vld [vmem:[#allocation7 + $0x5d8] sm:$0xff]
    %v1438 = vld [vmem:[#allocation7 + $0x5e0] sm:$0xff]
    %v1439 = vld [vmem:[#allocation7 + $0x5e8] sm:$0xff]
    %v1440 = vld [vmem:[#allocation7 + $0x5f0] sm:$0xff]
    %v1441 = vld [vmem:[#allocation7 + $0x5f8] sm:$0xff]
    %v1442 = vld [vmem:[#allocation7 + $0x600] sm:$0xff]
    %v1443 = vld [vmem:[#allocation7 + $0x608] sm:$0xff]
    %v1444 = vld [vmem:[#allocation7 + $0x610] sm:$0xff]
    %v1445 = vld [vmem:[#allocation7 + $0x618] sm:$0xff]
    %v1446 = vld [vmem:[#allocation7 + $0x620] sm:$0xff]
    %v1447 = vld [vmem:[#allocation7 + $0x628] sm:$0xff]
    %v1448 = vld [vmem:[#allocation7 + $0x630] sm:$0xff]
    %v1449 = vld [vmem:[#allocation7 + $0x638] sm:$0xff]
    %v1450 = vld [vmem:[#allocation7 + $0x640] sm:$0xff]
    %v1451 = vld [vmem:[#allocation7 + $0x648] sm:$0xff]
    %v1452 = vld [vmem:[#allocation7 + $0x650] sm:$0xff]
    %v1453 = vld [vmem:[#allocation7 + $0x658] sm:$0xff]
    %v1454 = vld [vmem:[#allocation7 + $0x660] sm:$0xff]
    %v1455 = vld [vmem:[#allocation7 + $0x668] sm:$0xff]
    %v1456 = vld [vmem:[#allocation7 + $0x670] sm:$0xff]
    %v1457 = vld [vmem:[#allocation7 + $0x678] sm:$0xff]
    %v1458 = vld [vmem:[#allocation7 + $0x680] sm:$0xff]
    %v1459 = vld [vmem:[#allocation7 + $0x688] sm:$0xff]
    %v1460 = vld [vmem:[#allocation7 + $0x690] sm:$0xff]
    %v1461 = vld [vmem:[#allocation7 + $0x698] sm:$0xff]
    %v1462 = vld [vmem:[#allocation7 + $0x6a0] sm:$0xff]
    %v1463 = vld [vmem:[#allocation7 + $0x6a8] sm:$0xff]
    %v1464 = vld [vmem:[#allocation7 + $0x6b0] sm:$0xff]
    %v1465 = vld [vmem:[#allocation7 + $0x6b8] sm:$0xff]
    %v1466 = vld [vmem:[#allocation7 + $0x6c0] sm:$0xff]
    %v1467 = vld [vmem:[#allocation7 + $0x6c8] sm:$0xff]
    %v1468 = vld [vmem:[#allocation7 + $0x6d0] sm:$0xff]
    %v1469 = vld [vmem:[#allocation7 + $0x6d8] sm:$0xff]
    %v1470 = vld [vmem:[#allocation7 + $0x6e0] sm:$0xff]
    %v1471 = vld [vmem:[#allocation7 + $0x6e8] sm:$0xff]
    %v1472 = vld [vmem:[#allocation7 + $0x6f0] sm:$0xff]
    %v1473 = vld [vmem:[#allocation7 + $0x6f8] sm:$0xff]
    %v1474 = vld [vmem:[#allocation7 + $0x700] sm:$0xff]
    %v1475 = vld [vmem:[#allocation7 + $0x708] sm:$0xff]
    %v1476 = vld [vmem:[#allocation7 + $0x710] sm:$0xff]
    %v1477 = vld [vmem:[#allocation7 + $0x718] sm:$0xff]
    %v1478 = vld [vmem:[#allocation7 + $0x720] sm:$0xff]
    %v1479 = vld [vmem:[#allocation7 + $0x728] sm:$0xff]
    %v1480 = vld [vmem:[#allocation7 + $0x730] sm:$0xff]
    %v1481 = vld [vmem:[#allocation7 + $0x738] sm:$0xff]
    %v1482 = vld [vmem:[#allocation7 + $0x740] sm:$0xff]
    %v1483 = vld [vmem:[#allocation7 + $0x748] sm:$0xff]
    %v1484 = vld [vmem:[#allocation7 + $0x750] sm:$0xff]
    %v1485 = vld [vmem:[#allocation7 + $0x758] sm:$0xff]
    %v1486 = vld [vmem:[#allocation7 + $0x760] sm:$0xff]
    %v1487 = vld [vmem:[#allocation7 + $0x768] sm:$0xff]
    %v1488 = vld [vmem:[#allocation7 + $0x770] sm:$0xff]
    %v1489 = vld [vmem:[#allocation7 + $0x778] sm:$0xff]
    %v1490 = vld [vmem:[#allocation7 + $0x780] sm:$0xff]
    %v1491 = vld [vmem:[#allocation7 + $0x788] sm:$0xff]
    %v1492 = vld [vmem:[#allocation7 + $0x790] sm:$0xff]
    %v1493 = vld [vmem:[#allocation7 + $0x798] sm:$0xff]
    %v1494 = vld [vmem:[#allocation7 + $0x7a0] sm:$0xff]
    %v1495 = vld [vmem:[#allocation7 + $0x7a8] sm:$0xff]
    %v1496 = vld [vmem:[#allocation7 + $0x7b0] sm:$0xff]
    %v1497 = vld [vmem:[#allocation7 + $0x7b8] sm:$0xff]
    %v1498 = vld [vmem:[#allocation7 + $0x7c0] sm:$0xff]
    %v1499 = vld [vmem:[#allocation7 + $0x7c8] sm:$0xff]
    %v1500 = vld [vmem:[#allocation7 + $0x7d0] sm:$0xff]
    %v1501 = vld [vmem:[#allocation7 + $0x7d8] sm:$0xff]
    %v1502 = vld [vmem:[#allocation7 + $0x7e0] sm:$0xff]
    %v1503 = vld [vmem:[#allocation7 + $0x7e8] sm:$0xff]
    %v1504 = vld [vmem:[#allocation7 + $0x7f0] sm:$0xff]
    %v1505 = vld [vmem:[#allocation7 + $0x7f8] sm:$0xff]
    %v1506 = vld [vmem:[#allocation7 + $0x800] sm:$0xff]
    %v1507 = vld [vmem:[#allocation7 + $0x808] sm:$0xff]
    %v1508 = vld [vmem:[#allocation7 + $0x810] sm:$0xff]
    %v1509 = vld [vmem:[#allocation7 + $0x818] sm:$0xff]
    %v1510 = vld [vmem:[#allocation7 + $0x820] sm:$0xff]
    %v1511 = vld [vmem:[#allocation7 + $0x828] sm:$0xff]
    %v1512 = vld [vmem:[#allocation7 + $0x830] sm:$0xff]
    %v1513 = vld [vmem:[#allocation7 + $0x838] sm:$0xff]
    %v1514 = vld [vmem:[#allocation7 + $0x840] sm:$0xff]
    %v1515 = vld [vmem:[#allocation7 + $0x848] sm:$0xff]
    %v1516 = vld [vmem:[#allocation7 + $0x850] sm:$0xff]
    %v1517 = vld [vmem:[#allocation7 + $0x858] sm:$0xff]
    %v1518 = vld [vmem:[#allocation7 + $0x860] sm:$0xff]
    %v1519 = vld [vmem:[#allocation7 + $0x868] sm:$0xff]
    %v1520 = vld [vmem:[#allocation7 + $0x870] sm:$0xff]
    %v1521 = vld [vmem:[#allocation7 + $0x878] sm:$0xff]
    %v1522 = vld [vmem:[#allocation7 + $0x880] sm:$0xff]
    %v1523 = vld [vmem:[#allocation7 + $0x888] sm:$0xff]
    %v1524 = vld [vmem:[#allocation7 + $0x890] sm:$0xff]
    %v1525 = vld [vmem:[#allocation7 + $0x898] sm:$0xff]
    %v1526 = vld [vmem:[#allocation7 + $0x8a0] sm:$0xff]
    %v1527 = vld [vmem:[#allocation7 + $0x8a8] sm:$0xff]
    %v1528 = vld [vmem:[#allocation7 + $0x8b0] sm:$0xff]
    %v1529 = vld [vmem:[#allocation7 + $0x8b8] sm:$0xff]
    %v1530 = vld [vmem:[#allocation7 + $0x8c0] sm:$0xff]
    %v1531 = vld [vmem:[#allocation7 + $0x8c8] sm:$0xff]
    %v1532 = vld [vmem:[#allocation7 + $0x8d0] sm:$0xff]
    %v1533 = vld [vmem:[#allocation7 + $0x8d8] sm:$0xff]
    %v1534 = vld [vmem:[#allocation7 + $0x8e0] sm:$0xff]
    %v1535 = vld [vmem:[#allocation7 + $0x8e8] sm:$0xff]
    %v1536 = vld [vmem:[#allocation7 + $0x8f0] sm:$0xff]
    %v1537 = vld [vmem:[#allocation7 + $0x8f8] sm:$0xff]
    %v1538 = vld [vmem:[#allocation7 + $0x900] sm:$0xff]
    %v1539 = vld [vmem:[#allocation7 + $0x908] sm:$0xff]
    %v1540 = vld [vmem:[#allocation7 + $0x910] sm:$0xff]
    %v1541 = vld [vmem:[#allocation7 + $0x918] sm:$0xff]
    %v1542 = vld [vmem:[#allocation7 + $0x920] sm:$0xff]
    %v1543 = vld [vmem:[#allocation7 + $0x928] sm:$0xff]
    %v1544 = vld [vmem:[#allocation7 + $0x930] sm:$0xff]
    %v1545 = vld [vmem:[#allocation7 + $0x938] sm:$0xff]
    %v1546 = vld [vmem:[#allocation7 + $0x940] sm:$0xff]
    %v1547 = vld [vmem:[#allocation7 + $0x948] sm:$0xff]
    %v1548 = vld [vmem:[#allocation7 + $0x950] sm:$0xff]
    %v1549 = vld [vmem:[#allocation7 + $0x958] sm:$0xff]
    %v1550 = vld [vmem:[#allocation7 + $0x960] sm:$0xff]
    %v1551 = vld [vmem:[#allocation7 + $0x968] sm:$0xff]
    %v1552 = vld [vmem:[#allocation7 + $0x970] sm:$0xff]
    %v1553 = vld [vmem:[#allocation7 + $0x978] sm:$0xff]
    %v1554 = vld [vmem:[#allocation7 + $0x980] sm:$0xff]
    %v1555 = vld [vmem:[#allocation7 + $0x988] sm:$0xff]
    %v1556 = vld [vmem:[#allocation7 + $0x990] sm:$0xff]
    %v1557 = vld [vmem:[#allocation7 + $0x998] sm:$0xff]
    %v1558 = vld [vmem:[#allocation7 + $0x9a0] sm:$0xff]
    %v1559 = vld [vmem:[#allocation7 + $0x9a8] sm:$0xff]
    %v1560 = vld [vmem:[#allocation7 + $0x9b0] sm:$0xff]
    %v1561 = vld [vmem:[#allocation7 + $0x9b8] sm:$0xff]
    %v1562 = vld [vmem:[#allocation7 + $0x9c0] sm:$0xff]
    %v1563 = vld [vmem:[#allocation7 + $0x9c8] sm:$0xff]
    %v1564 = vld [vmem:[#allocation7 + $0x9d0] sm:$0xff]
    %v1565 = vld [vmem:[#allocation7 + $0x9d8] sm:$0xff]
    %v1566 = vld [vmem:[#allocation7 + $0x9e0] sm:$0xff]
    %v1567 = vld [vmem:[#allocation7 + $0x9e8] sm:$0xff]
    %v1568 = vld [vmem:[#allocation7 + $0x9f0] sm:$0xff]
    %v1569 = vld [vmem:[#allocation7 + $0x9f8] sm:$0xff]
    %v1570 = vld [vmem:[#allocation7 + $0xa00] sm:$0xff]
    %v1571 = vld [vmem:[#allocation7 + $0xa08] sm:$0xff]
    %v1572 = vld [vmem:[#allocation7 + $0xa10] sm:$0xff]
    %v1573 = vld [vmem:[#allocation7 + $0xa18] sm:$0xff]
    %v1574 = vld [vmem:[#allocation7 + $0xa20] sm:$0xff]
    %v1575 = vld [vmem:[#allocation7 + $0xa28] sm:$0xff]
    %v1576 = vld [vmem:[#allocation7 + $0xa30] sm:$0xff]
    %v1577 = vld [vmem:[#allocation7 + $0xa38] sm:$0xff]
    %v1578 = vld [vmem:[#allocation7 + $0xa40] sm:$0xff]
    %v1579 = vld [vmem:[#allocation7 + $0xa48] sm:$0xff]
    %v1580 = vld [vmem:[#allocation7 + $0xa50] sm:$0xff]
    %v1581 = vld [vmem:[#allocation7 + $0xa58] sm:$0xff]
    %v1582 = vld [vmem:[#allocation7 + $0xa60] sm:$0xff]
    %v1583 = vld [vmem:[#allocation7 + $0xa68] sm:$0xff]
    %v1584 = vld [vmem:[#allocation7 + $0xa70] sm:$0xff]
    %v1585 = vld [vmem:[#allocation7 + $0xa78] sm:$0xff]
    %v1586 = vld [vmem:[#allocation7 + $0xa80] sm:$0xff]
    %v1587 = vld [vmem:[#allocation7 + $0xa88] sm:$0xff]
    %v1588 = vld [vmem:[#allocation7 + $0xa90] sm:$0xff]
    %v1589 = vld [vmem:[#allocation7 + $0xa98] sm:$0xff]
    %v1590 = vld [vmem:[#allocation7 + $0xaa0] sm:$0xff]
    %v1591 = vld [vmem:[#allocation7 + $0xaa8] sm:$0xff]
    %v1592 = vld [vmem:[#allocation7 + $0xab0] sm:$0xff]
    %v1593 = vld [vmem:[#allocation7 + $0xab8] sm:$0xff]
    %v1594 = vld [vmem:[#allocation7 + $0xac0] sm:$0xff]
    %v1595 = vld [vmem:[#allocation7 + $0xac8] sm:$0xff]
    %v1596 = vld [vmem:[#allocation7 + $0xad0] sm:$0xff]
    %v1597 = vld [vmem:[#allocation7 + $0xad8] sm:$0xff]
    %v1598 = vld [vmem:[#allocation7 + $0xae0] sm:$0xff]
    %v1599 = vld [vmem:[#allocation7 + $0xae8] sm:$0xff]
    %v1600 = vld [vmem:[#allocation7 + $0xaf0] sm:$0xff]
    %v1601 = vld [vmem:[#allocation7 + $0xaf8] sm:$0xff]
    %v1602 = vld [vmem:[#allocation7 + $0xb00] sm:$0xff]
    %v1603 = vld [vmem:[#allocation7 + $0xb08] sm:$0xff]
    %v1604 = vld [vmem:[#allocation7 + $0xb10] sm:$0xff]
    %v1605 = vld [vmem:[#allocation7 + $0xb18] sm:$0xff]
    %v1606 = vld [vmem:[#allocation7 + $0xb20] sm:$0xff]
    %v1607 = vld [vmem:[#allocation7 + $0xb28] sm:$0xff]
    %v1608 = vld [vmem:[#allocation7 + $0xb30] sm:$0xff]
    %v1609 = vld [vmem:[#allocation7 + $0xb38] sm:$0xff]
    %v1610 = vld [vmem:[#allocation7 + $0xb40] sm:$0xff]
    %v1611 = vld [vmem:[#allocation7 + $0xb48] sm:$0xff]
    %v1612 = vld [vmem:[#allocation7 + $0xb50] sm:$0xff]
    %v1613 = vld [vmem:[#allocation7 + $0xb58] sm:$0xff]
    %v1614 = vld [vmem:[#allocation7 + $0xb60] sm:$0xff]
    %v1615 = vld [vmem:[#allocation7 + $0xb68] sm:$0xff]
    %v1616 = vld [vmem:[#allocation7 + $0xb70] sm:$0xff]
    %v1617 = vld [vmem:[#allocation7 + $0xb78] sm:$0xff]
    %v1618 = vld [vmem:[#allocation7 + $0xb80] sm:$0xff]
    %v1619 = vld [vmem:[#allocation7 + $0xb88] sm:$0xff]
    %v1620 = vld [vmem:[#allocation7 + $0xb90] sm:$0xff]
    %v1621 = vld [vmem:[#allocation7 + $0xb98] sm:$0xff]
    %v1622 = vld [vmem:[#allocation7 + $0xba0] sm:$0xff]
    %v1623 = vld [vmem:[#allocation7 + $0xba8] sm:$0xff]
    %v1624 = vld [vmem:[#allocation7 + $0xbb0] sm:$0xff]
    %v1625 = vld [vmem:[#allocation7 + $0xbb8] sm:$0xff]
    %v1626 = vld [vmem:[#allocation7 + $0xbc0] sm:$0xff]
    %v1627 = vld [vmem:[#allocation7 + $0xbc8] sm:$0xff]
    %v1628 = vld [vmem:[#allocation7 + $0xbd0] sm:$0xff]
    %v1629 = vld [vmem:[#allocation7 + $0xbd8] sm:$0xff]
    %v1630 = vld [vmem:[#allocation7 + $0xbe0] sm:$0xff]
    %v1631 = vld [vmem:[#allocation7 + $0xbe8] sm:$0xff]
    %v1632 = vld [vmem:[#allocation7 + $0xbf0] sm:$0xff]
    %v1633 = vld [vmem:[#allocation7 + $0xbf8] sm:$0xff]
    %v1634 = vld [vmem:[#allocation7 + $0xc00] sm:$0xff]
    %v1635 = vld [vmem:[#allocation7 + $0xc08] sm:$0xff]
    %v1636 = vld [vmem:[#allocation7 + $0xc10] sm:$0xff]
    %v1637 = vld [vmem:[#allocation7 + $0xc18] sm:$0xff]
    %v1638 = vld [vmem:[#allocation7 + $0xc20] sm:$0xff]
    %v1639 = vld [vmem:[#allocation7 + $0xc28] sm:$0xff]
    %v1640 = vld [vmem:[#allocation7 + $0xc30] sm:$0xff]
    %v1641 = vld [vmem:[#allocation7 + $0xc38] sm:$0xff]
    %v1642 = vld [vmem:[#allocation7 + $0xc40] sm:$0xff]
    %v1643 = vld [vmem:[#allocation7 + $0xc48] sm:$0xff]
    %v1644 = vld [vmem:[#allocation7 + $0xc50] sm:$0xff]
    %v1645 = vld [vmem:[#allocation7 + $0xc58] sm:$0xff]
    %v1646 = vld [vmem:[#allocation7 + $0xc60] sm:$0xff]
    %v1647 = vld [vmem:[#allocation7 + $0xc68] sm:$0xff]
    %v1648 = vld [vmem:[#allocation7 + $0xc70] sm:$0xff]
    %v1649 = vld [vmem:[#allocation7 + $0xc78] sm:$0xff]
    %v1650 = vld [vmem:[#allocation7 + $0xc80] sm:$0xff]
    %v1651 = vld [vmem:[#allocation7 + $0xc88] sm:$0xff]
    %v1652 = vld [vmem:[#allocation7 + $0xc90] sm:$0xff]
    %v1653 = vld [vmem:[#allocation7 + $0xc98] sm:$0xff]
    %v1654 = vld [vmem:[#allocation7 + $0xca0] sm:$0xff]
    %v1655 = vld [vmem:[#allocation7 + $0xca8] sm:$0xff]
    %v1656 = vld [vmem:[#allocation7 + $0xcb0] sm:$0xff]
    %v1657 = vld [vmem:[#allocation7 + $0xcb8] sm:$0xff]
    %v1658 = vld [vmem:[#allocation7 + $0xcc0] sm:$0xff]
    %v1659 = vld [vmem:[#allocation7 + $0xcc8] sm:$0xff]
    %v1660 = vld [vmem:[#allocation7 + $0xcd0] sm:$0xff]
    %v1661 = vld [vmem:[#allocation7 + $0xcd8] sm:$0xff]
    %v1662 = vld [vmem:[#allocation7 + $0xce0] sm:$0xff]
    %v1663 = vld [vmem:[#allocation7 + $0xce8] sm:$0xff]
    %v1664 = vld [vmem:[#allocation7 + $0xcf0] sm:$0xff]
    %v1665 = vld [vmem:[#allocation7 + $0xcf8] sm:$0xff]
    %v1666 = vld [vmem:[#allocation7 + $0xd00] sm:$0xff]
    %v1667 = vld [vmem:[#allocation7 + $0xd08] sm:$0xff]
    %v1668 = vld [vmem:[#allocation7 + $0xd10] sm:$0xff]
    %v1669 = vld [vmem:[#allocation7 + $0xd18] sm:$0xff]
    %v1670 = vld [vmem:[#allocation7 + $0xd20] sm:$0xff]
    %v1671 = vld [vmem:[#allocation7 + $0xd28] sm:$0xff]
    %v1672 = vld [vmem:[#allocation7 + $0xd30] sm:$0xff]
    %v1673 = vld [vmem:[#allocation7 + $0xd38] sm:$0xff]
    %v1674 = vld [vmem:[#allocation7 + $0xd40] sm:$0xff]
    %v1675 = vld [vmem:[#allocation7 + $0xd48] sm:$0xff]
    %v1676 = vld [vmem:[#allocation7 + $0xd50] sm:$0xff]
    %v1677 = vld [vmem:[#allocation7 + $0xd58] sm:$0xff]
    %v1678 = vld [vmem:[#allocation7 + $0xd60] sm:$0xff]
    %v1679 = vld [vmem:[#allocation7 + $0xd68] sm:$0xff]
    %v1680 = vld [vmem:[#allocation7 + $0xd70] sm:$0xff]
    %v1681 = vld [vmem:[#allocation7 + $0xd78] sm:$0xff]
    %v1682 = vld [vmem:[#allocation7 + $0xd80] sm:$0xff]
    %v1683 = vld [vmem:[#allocation7 + $0xd88] sm:$0xff]
    %v1684 = vld [vmem:[#allocation7 + $0xd90] sm:$0xff]
    %v1685 = vld [vmem:[#allocation7 + $0xd98] sm:$0xff]
    %v1686 = vld [vmem:[#allocation7 + $0xda0] sm:$0xff]
    %v1687 = vld [vmem:[#allocation7 + $0xda8] sm:$0xff]
    %v1688 = vld [vmem:[#allocation7 + $0xdb0] sm:$0xff]
    %v1689 = vld [vmem:[#allocation7 + $0xdb8] sm:$0xff]
    %v1690 = vld [vmem:[#allocation7 + $0xdc0] sm:$0xff]
    %v1691 = vld [vmem:[#allocation7 + $0xdc8] sm:$0xff]
    %v1692 = vld [vmem:[#allocation7 + $0xdd0] sm:$0xff]
    %v1693 = vld [vmem:[#allocation7 + $0xdd8] sm:$0xff]
    %v1694 = vld [vmem:[#allocation7 + $0xde0] sm:$0xff]
    %v1695 = vld [vmem:[#allocation7 + $0xde8] sm:$0xff]
    %v1696 = vld [vmem:[#allocation7 + $0xdf0] sm:$0xff]
    %v1697 = vld [vmem:[#allocation7 + $0xdf8] sm:$0xff]
    %v1698 = vld [vmem:[#allocation7 + $0xe00] sm:$0xff]
    %v1699 = vld [vmem:[#allocation7 + $0xe08] sm:$0xff]
    %v1700 = vld [vmem:[#allocation7 + $0xe10] sm:$0xff]
    %v1701 = vld [vmem:[#allocation7 + $0xe18] sm:$0xff]
    %v1702 = vld [vmem:[#allocation7 + $0xe20] sm:$0xff]
    %v1703 = vld [vmem:[#allocation7 + $0xe28] sm:$0xff]
    %v1704 = vld [vmem:[#allocation7 + $0xe30] sm:$0xff]
    %v1705 = vld [vmem:[#allocation7 + $0xe38] sm:$0xff]
    %v1706 = vld [vmem:[#allocation7 + $0xe40] sm:$0xff]
    %v1707 = vld [vmem:[#allocation7 + $0xe48] sm:$0xff]
    %v1708 = vld [vmem:[#allocation7 + $0xe50] sm:$0xff]
    %v1709 = vld [vmem:[#allocation7 + $0xe58] sm:$0xff]
    %v1710 = vld [vmem:[#allocation7 + $0xe60] sm:$0xff]
    %v1711 = vld [vmem:[#allocation7 + $0xe68] sm:$0xff]
    %v1712 = vld [vmem:[#allocation7 + $0xe70] sm:$0xff]
    %v1713 = vld [vmem:[#allocation7 + $0xe78] sm:$0xff]
    %v1714 = vld [vmem:[#allocation7 + $0xe80] sm:$0xff]
    %v1715 = vld [vmem:[#allocation7 + $0xe88] sm:$0xff]
    %v1716 = vld [vmem:[#allocation7 + $0xe90] sm:$0xff]
    %v1717 = vld [vmem:[#allocation7 + $0xe98] sm:$0xff]
    %v1718 = vld [vmem:[#allocation7 + $0xea0] sm:$0xff]
    %v1719 = vld [vmem:[#allocation7 + $0xea8] sm:$0xff]
    %v1720 = vld [vmem:[#allocation7 + $0xeb0] sm:$0xff]
    %v1721 = vld [vmem:[#allocation7 + $0xeb8] sm:$0xff]
    %v1722 = vld [vmem:[#allocation7 + $0xec0] sm:$0xff]
    %v1723 = vld [vmem:[#allocation7 + $0xec8] sm:$0xff]
    %v1724 = vld [vmem:[#allocation7 + $0xed0] sm:$0xff]
    %v1725 = vld [vmem:[#allocation7 + $0xed8] sm:$0xff]
    %v1726 = vld [vmem:[#allocation7 + $0xee0] sm:$0xff]
    %v1727 = vld [vmem:[#allocation7 + $0xee8] sm:$0xff]
    %v1728 = vld [vmem:[#allocation7 + $0xef0] sm:$0xff]
    %v1729 = vld [vmem:[#allocation7 + $0xef8] sm:$0xff]
    %v1730 = vld [vmem:[#allocation7 + $0xf00] sm:$0xff]
    %v1731 = vld [vmem:[#allocation7 + $0xf08] sm:$0xff]
    %v1732 = vld [vmem:[#allocation7 + $0xf10] sm:$0xff]
    %v1733 = vld [vmem:[#allocation7 + $0xf18] sm:$0xff]
    %v1734 = vld [vmem:[#allocation7 + $0xf20] sm:$0xff]
    %v1735 = vld [vmem:[#allocation7 + $0xf28] sm:$0xff]
    %v1736 = vld [vmem:[#allocation7 + $0xf30] sm:$0xff]
    %v1737 = vld [vmem:[#allocation7 + $0xf38] sm:$0xff]
    %v1738 = vld [vmem:[#allocation7 + $0xf40] sm:$0xff]
    %v1739 = vld [vmem:[#allocation7 + $0xf48] sm:$0xff]
    %v1740 = vld [vmem:[#allocation7 + $0xf50] sm:$0xff]
    %v1741 = vld [vmem:[#allocation7 + $0xf58] sm:$0xff]
    %v1742 = vld [vmem:[#allocation7 + $0xf60] sm:$0xff]
    %v1743 = vld [vmem:[#allocation7 + $0xf68] sm:$0xff]
    %v1744 = vld [vmem:[#allocation7 + $0xf70] sm:$0xff]
    %v1745 = vld [vmem:[#allocation7 + $0xf78] sm:$0xff]
    %v1746 = vld [vmem:[#allocation7 + $0xf80] sm:$0xff]
    %v1747 = vld [vmem:[#allocation7 + $0xf88] sm:$0xff]
    %v1748 = vld [vmem:[#allocation7 + $0xf90] sm:$0xff]
    %v1749 = vld [vmem:[#allocation7 + $0xf98] sm:$0xff]
    %v1750 = vld [vmem:[#allocation7 + $0xfa0] sm:$0xff]
    %v1751 = vld [vmem:[#allocation7 + $0xfa8] sm:$0xff]
    %v1752 = vld [vmem:[#allocation7 + $0xfb0] sm:$0xff]
    %v1753 = vld [vmem:[#allocation7 + $0xfb8] sm:$0xff]
    %v1754 = vld [vmem:[#allocation7 + $0xfc0] sm:$0xff]
    %v1755 = vld [vmem:[#allocation7 + $0xfc8] sm:$0xff]
    %v1756 = vld [vmem:[#allocation7 + $0xfd0] sm:$0xff]
    %v1757 = vld [vmem:[#allocation7 + $0xfd8] sm:$0xff]
    %v1758 = vld [vmem:[#allocation7 + $0xfe0] sm:$0xff]
    %v1759 = vld [vmem:[#allocation7 + $0xfe8] sm:$0xff]
    %v1760 = vld [vmem:[#allocation7 + $0xff0] sm:$0xff]
    %v1761 = vld [vmem:[#allocation7 + $0xff8] sm:$0xff]
    %v1762 = vld [vmem:[#allocation7 + $0x1000] sm:$0xff]
    %v1763 = vld [vmem:[#allocation7 + $0x1008] sm:$0xff]
    %v1764 = vld [vmem:[#allocation7 + $0x1010] sm:$0xff]
    %v1765 = vld [vmem:[#allocation7 + $0x1018] sm:$0xff]
    %v1766 = vld [vmem:[#allocation7 + $0x1020] sm:$0xff]
    %v1767 = vld [vmem:[#allocation7 + $0x1028] sm:$0xff]
    %v1768 = vld [vmem:[#allocation7 + $0x1030] sm:$0xff]
    %v1769 = vld [vmem:[#allocation7 + $0x1038] sm:$0xff]
    %v1770 = vld [vmem:[#allocation7 + $0x1040] sm:$0xff]
    %v1771 = vld [vmem:[#allocation7 + $0x1048] sm:$0xff]
    %v1772 = vld [vmem:[#allocation7 + $0x1050] sm:$0xff]
    %v1773 = vld [vmem:[#allocation7 + $0x1058] sm:$0xff]
    %v1774 = vld [vmem:[#allocation7 + $0x1060] sm:$0xff]
    %v1775 = vld [vmem:[#allocation7 + $0x1068] sm:$0xff]
    %v1776 = vld [vmem:[#allocation7 + $0x1070] sm:$0xff]
    %v1777 = vld [vmem:[#allocation7 + $0x1078] sm:$0xff]
    %v1778 = vld [vmem:[#allocation7 + $0x1080] sm:$0xff]
    %v1779 = vld [vmem:[#allocation7 + $0x1088] sm:$0xff]
    %v1780 = vld [vmem:[#allocation7 + $0x1090] sm:$0xff]
    %v1781 = vld [vmem:[#allocation7 + $0x1098] sm:$0xff]
    %v1782 = vld [vmem:[#allocation7 + $0x10a0] sm:$0xff]
    %v1783 = vld [vmem:[#allocation7 + $0x10a8] sm:$0xff]
    %v1784 = vld [vmem:[#allocation7 + $0x10b0] sm:$0xff]
    %v1785 = vld [vmem:[#allocation7 + $0x10b8] sm:$0xff]
    %v1786 = vld [vmem:[#allocation7 + $0x10c0] sm:$0xff]
    %v1787 = vld [vmem:[#allocation7 + $0x10c8] sm:$0xff]
    %v1788 = vld [vmem:[#allocation7 + $0x10d0] sm:$0xff]
    %v1789 = vld [vmem:[#allocation7 + $0x10d8] sm:$0xff]
    %v1790 = vld [vmem:[#allocation7 + $0x10e0] sm:$0xff]
    %v1791 = vld [vmem:[#allocation7 + $0x10e8] sm:$0xff]
    %v1792 = vld [vmem:[#allocation7 + $0x10f0] sm:$0xff]
    %v1793 = vld [vmem:[#allocation7 + $0x10f8] sm:$0xff]
    %1794 = vmatprep.subr.mxu0 %v1251
    %1795 = vmatpush1.msra.mxu0 %v1250
    %1796 = vmatprep.subr.mxu0 %v1253
    %1797 = vmatpush1.msra.mxu0 %v1252
    %1798 = vmatprep.subr.mxu0 %v1255
    %1799 = vmatpush1.msra.mxu0 %v1254
    %1800 = vmatprep.subr.mxu0 %v1257
    %1801 = vmatpush1.msra.mxu0 %v1256
    %1802 = vmatprep.subr.mxu0 %v1259
    %1803 = vmatpush1.msra.mxu0 %v1258
    %1804 = vmatprep.subr.mxu0 %v1261
    %1805 = vmatpush1.msra.mxu0 %v1260
    %1806 = vmatprep.subr.mxu0 %v1263
    %1807 = vmatpush1.msra.mxu0 %v1262
    %1808 = vmatprep.subr.mxu0 %v1265
    %1809 = vmatpush1.msra.mxu0 %v1264
    %1810 = vmatprep.subr.mxu0 %v1267
    %1811 = vmatpush1.msra.mxu0 %v1266
    %1812 = vmatprep.subr.mxu0 %v1269
    %1813 = vmatpush1.msra.mxu0 %v1268
    %1814 = vmatprep.subr.mxu0 %v1271
    %1815 = vmatpush1.msra.mxu0 %v1270
    %1816 = vmatprep.subr.mxu0 %v1273
    %1817 = vmatpush1.msra.mxu0 %v1272
    %1818 = vmatprep.subr.mxu0 %v1275
    %1819 = vmatpush1.msra.mxu0 %v1274
    %1820 = vmatprep.subr.mxu0 %v1277
    %1821 = vmatpush1.msra.mxu0 %v1276
    %1822 = vmatprep.subr.mxu0 %v1279
    %1823 = vmatpush1.msra.mxu0 %v1278
    %1824 = vmatprep.subr.mxu0 %v1281
    %1825 = vmatpush1.msra.mxu0 %v1280
    %1826 = vmatprep.subr.mxu0 %v1283
    %1827 = vmatpush1.msra.mxu0 %v1282
    %1828 = vmatprep.subr.mxu0 %v1285
    %1829 = vmatpush1.msra.mxu0 %v1284
    %1830 = vmatprep.subr.mxu0 %v1287
    %1831 = vmatpush1.msra.mxu0 %v1286
    %1832 = vmatprep.subr.mxu0 %v1289
    %1833 = vmatpush1.msra.mxu0 %v1288
    %1834 = vmatprep.subr.mxu0 %v1291
    %1835 = vmatpush1.msra.mxu0 %v1290
    %1836 = vmatprep.subr.mxu0 %v1293
    %1837 = vmatpush1.msra.mxu0 %v1292
    %1838 = vmatprep.subr.mxu0 %v1295
    %1839 = vmatpush1.msra.mxu0 %v1294
    %1840 = vmatprep.subr.mxu0 %v1297
    %1841 = vmatpush1.msra.mxu0 %v1296
    %1842 = vmatprep.subr.mxu0 %v1299
    %1843 = vmatpush1.msra.mxu0 %v1298
    %1844 = vmatprep.subr.mxu0 %v1301
    %1845 = vmatpush1.msra.mxu0 %v1300
    %1846 = vmatprep.subr.mxu0 %v1303
    %1847 = vmatpush1.msra.mxu0 %v1302
    %1848 = vmatprep.subr.mxu0 %v1305
    %1849 = vmatpush1.msra.mxu0 %v1304
    %1850 = vmatprep.subr.mxu0 %v1307
    %1851 = vmatpush1.msra.mxu0 %v1306
    %1852 = vmatprep.subr.mxu0 %v1309
    %1853 = vmatpush1.msra.mxu0 %v1308
    %1854 = vmatprep.subr.mxu0 %v1311
    %1855 = vmatpush1.msra.mxu0 %v1310
    %1856 = vmatprep.subr.mxu0 %v1313
    %1857 = vmatpush1.msra.mxu0 %v1312
    %1858 = vmatprep.mubr.f32.mxu0 %v681
    %1859 = vmatmul.mubr.f32.gmra.mrb[0].mxu0 %v679
    %v1860 = vpop.f32.mrb[0].mxu0
    %v1861 = vadd.f32 0.0, %v1860
    %v1862 = vpop.f32.mrb[0].mxu0
    %v1863 = vadd.f32 0.0, %v1862
    %1864 = vdwg.mxu0
    %1865 = vmatprep.subr.mxu0 %v1315
    %1866 = vmatpush1.msra.mxu0 %v1314
    %1867 = vmatprep.subr.mxu0 %v1317
    %1868 = vmatpush1.msra.mxu0 %v1316
    %1869 = vmatprep.subr.mxu0 %v1319
    %1870 = vmatpush1.msra.mxu0 %v1318
    %1871 = vmatprep.subr.mxu0 %v1321
    %1872 = vmatpush1.msra.mxu0 %v1320
    %1873 = vmatprep.subr.mxu0 %v1323
    %1874 = vmatpush1.msra.mxu0 %v1322
    %1875 = vmatprep.subr.mxu0 %v1325
    %1876 = vmatpush1.msra.mxu0 %v1324
    %1877 = vmatprep.subr.mxu0 %v1327
    %1878 = vmatpush1.msra.mxu0 %v1326
    %1879 = vmatprep.subr.mxu0 %v1329
    %1880 = vmatpush1.msra.mxu0 %v1328
    %1881 = vmatprep.subr.mxu0 %v1331
    %1882 = vmatpush1.msra.mxu0 %v1330
    %1883 = vmatprep.subr.mxu0 %v1333
    %1884 = vmatpush1.msra.mxu0 %v1332
    %1885 = vmatprep.subr.mxu0 %v1335
    %1886 = vmatpush1.msra.mxu0 %v1334
    %1887 = vmatprep.subr.mxu0 %v1337
    %1888 = vmatpush1.msra.mxu0 %v1336
    %1889 = vmatprep.subr.mxu0 %v1339
    %1890 = vmatpush1.msra.mxu0 %v1338
    %1891 = vmatprep.subr.mxu0 %v1341
    %1892 = vmatpush1.msra.mxu0 %v1340
    %1893 = vmatprep.subr.mxu0 %v1343
    %1894 = vmatpush1.msra.mxu0 %v1342
    %1895 = vmatprep.subr.mxu0 %v1345
    %1896 = vmatpush1.msra.mxu0 %v1344
    %1897 = vmatprep.subr.mxu0 %v1347
    %1898 = vmatpush1.msra.mxu0 %v1346
    %1899 = vmatprep.subr.mxu0 %v1349
    %1900 = vmatpush1.msra.mxu0 %v1348
    %1901 = vmatprep.subr.mxu0 %v1351
    %1902 = vmatpush1.msra.mxu0 %v1350
    %1903 = vmatprep.subr.mxu0 %v1353
    %1904 = vmatpush1.msra.mxu0 %v1352
    %1905 = vmatprep.subr.mxu0 %v1355
    %1906 = vmatpush1.msra.mxu0 %v1354
    %1907 = vmatprep.subr.mxu0 %v1357
    %1908 = vmatpush1.msra.mxu0 %v1356
    %1909 = vmatprep.subr.mxu0 %v1359
    %1910 = vmatpush1.msra.mxu0 %v1358
    %1911 = vmatprep.subr.mxu0 %v1361
    %1912 = vmatpush1.msra.mxu0 %v1360
    %1913 = vmatprep.subr.mxu0 %v1363
    %1914 = vmatpush1.msra.mxu0 %v1362
    %1915 = vmatprep.subr.mxu0 %v1365
    %1916 = vmatpush1.msra.mxu0 %v1364
    %1917 = vmatprep.subr.mxu0 %v1367
    %1918 = vmatpush1.msra.mxu0 %v1366
    %1919 = vmatprep.subr.mxu0 %v1369
    %1920 = vmatpush1.msra.mxu0 %v1368
    %1921 = vmatprep.subr.mxu0 %v1371
    %1922 = vmatpush1.msra.mxu0 %v1370
    %1923 = vmatprep.subr.mxu0 %v1373
    %1924 = vmatpush1.msra.mxu0 %v1372
    %1925 = vmatprep.subr.mxu0 %v1375
    %1926 = vmatpush1.msra.mxu0 %v1374
    %1927 = vmatprep.subr.mxu0 %v1377
    %1928 = vmatpush1.msra.mxu0 %v1376
    %1929 = vmatprep.mubr.f32.mxu0 %v752
    %1930 = vmatmul.mubr.f32.gmra.mrb[0].mxu0 %v750
    %v1931 = vpop.f32.mrb[0].mxu0
    %v1932 = vadd.f32 %v1861, %v1931
    %v1933 = vpop.f32.mrb[0].mxu0
    %v1934 = vadd.f32 %v1863, %v1933
    %1935 = vdwg.mxu0
    %1936 = vmatprep.subr.mxu0 %v1379
    %1937 = vmatpush1.msra.mxu0 %v1378
    %1938 = vmatprep.subr.mxu0 %v1381
    %1939 = vmatpush1.msra.mxu0 %v1380
    %1940 = vmatprep.subr.mxu0 %v1383
    %1941 = vmatpush1.msra.mxu0 %v1382
    %1942 = vmatprep.subr.mxu0 %v1385
    %1943 = vmatpush1.msra.mxu0 %v1384
    %1944 = vmatprep.subr.mxu0 %v1387
    %1945 = vmatpush1.msra.mxu0 %v1386
    %1946 = vmatprep.subr.mxu0 %v1389
    %1947 = vmatpush1.msra.mxu0 %v1388
    %1948 = vmatprep.subr.mxu0 %v1391
    %1949 = vmatpush1.msra.mxu0 %v1390
    %1950 = vmatprep.subr.mxu0 %v1393
    %1951 = vmatpush1.msra.mxu0 %v1392
    %1952 = vmatprep.subr.mxu0 %v1395
    %1953 = vmatpush1.msra.mxu0 %v1394
    %1954 = vmatprep.subr.mxu0 %v1397
    %1955 = vmatpush1.msra.mxu0 %v1396
    %1956 = vmatprep.subr.mxu0 %v1399
    %1957 = vmatpush1.msra.mxu0 %v1398
    %1958 = vmatprep.subr.mxu0 %v1401
    %1959 = vmatpush1.msra.mxu0 %v1400
    %1960 = vmatprep.subr.mxu0 %v1403
    %1961 = vmatpush1.msra.mxu0 %v1402
    %1962 = vmatprep.subr.mxu0 %v1405
    %1963 = vmatpush1.msra.mxu0 %v1404
    %1964 = vmatprep.subr.mxu0 %v1407
    %1965 = vmatpush1.msra.mxu0 %v1406
    %1966 = vmatprep.subr.mxu0 %v1409
    %1967 = vmatpush1.msra.mxu0 %v1408
    %1968 = vmatprep.subr.mxu0 %v1411
    %1969 = vmatpush1.msra.mxu0 %v1410
    %1970 = vmatprep.subr.mxu0 %v1413
    %1971 = vmatpush1.msra.mxu0 %v1412
    %1972 = vmatprep.subr.mxu0 %v1415
    %1973 = vmatpush1.msra.mxu0 %v1414
    %1974 = vmatprep.subr.mxu0 %v1417
    %1975 = vmatpush1.msra.mxu0 %v1416
    %1976 = vmatprep.subr.mxu0 %v1419
    %1977 = vmatpush1.msra.mxu0 %v1418
    %1978 = vmatprep.subr.mxu0 %v1421
    %1979 = vmatpush1.msra.mxu0 %v1420
    %1980 = vmatprep.subr.mxu0 %v1423
    %1981 = vmatpush1.msra.mxu0 %v1422
    %1982 = vmatprep.subr.mxu0 %v1425
    %1983 = vmatpush1.msra.mxu0 %v1424
    %1984 = vmatprep.subr.mxu0 %v1427
    %1985 = vmatpush1.msra.mxu0 %v1426
    %1986 = vmatprep.subr.mxu0 %v1429
    %1987 = vmatpush1.msra.mxu0 %v1428
    %1988 = vmatprep.subr.mxu0 %v1431
    %1989 = vmatpush1.msra.mxu0 %v1430
    %1990 = vmatprep.subr.mxu0 %v1433
    %1991 = vmatpush1.msra.mxu0 %v1432
    %1992 = vmatprep.subr.mxu0 %v1435
    %1993 = vmatpush1.msra.mxu0 %v1434
    %1994 = vmatprep.subr.mxu0 %v1437
    %1995 = vmatpush1.msra.mxu0 %v1436
    %1996 = vmatprep.subr.mxu0 %v1439
    %1997 = vmatpush1.msra.mxu0 %v1438
    %1998 = vmatprep.subr.mxu0 %v1441
    %1999 = vmatpush1.msra.mxu0 %v1440
    %2000 = vmatprep.mubr.f32.mxu0 %v823
    %2001 = vmatmul.mubr.f32.gmra.mrb[0].mxu0 %v821
    %v2002 = vpop.f32.mrb[0].mxu0
    %v2003 = vadd.f32 %v1932, %v2002
    %v2004 = vpop.f32.mrb[0].mxu0
    %v2005 = vadd.f32 %v1934, %v2004
    %2006 = vdwg.mxu0
    %2007 = vmatprep.subr.mxu0 %v1443
    %2008 = vmatpush1.msra.mxu0 %v1442
    %2009 = vmatprep.subr.mxu0 %v1445
    %2010 = vmatpush1.msra.mxu0 %v1444
    %2011 = vmatprep.subr.mxu0 %v1447
    %2012 = vmatpush1.msra.mxu0 %v1446
    %2013 = vmatprep.subr.mxu0 %v1449
    %2014 = vmatpush1.msra.mxu0 %v1448
    %2015 = vmatprep.subr.mxu0 %v1451
    %2016 = vmatpush1.msra.mxu0 %v1450
    %2017 = vmatprep.subr.mxu0 %v1453
    %2018 = vmatpush1.msra.mxu0 %v1452
    %2019 = vmatprep.subr.mxu0 %v1455
    %2020 = vmatpush1.msra.mxu0 %v1454
    %2021 = vmatprep.subr.mxu0 %v1457
    %2022 = vmatpush1.msra.mxu0 %v1456
    %2023 = vmatprep.subr.mxu0 %v1459
    %2024 = vmatpush1.msra.mxu0 %v1458
    %2025 = vmatprep.subr.mxu0 %v1461
    %2026 = vmatpush1.msra.mxu0 %v1460
    %2027 = vmatprep.subr.mxu0 %v1463
    %2028 = vmatpush1.msra.mxu0 %v1462
    %2029 = vmatprep.subr.mxu0 %v1465
    %2030 = vmatpush1.msra.mxu0 %v1464
    %2031 = vmatprep.subr.mxu0 %v1467
    %2032 = vmatpush1.msra.mxu0 %v1466
    %2033 = vmatprep.subr.mxu0 %v1469
    %2034 = vmatpush1.msra.mxu0 %v1468
    %2035 = vmatprep.subr.mxu0 %v1471
    %2036 = vmatpush1.msra.mxu0 %v1470
    %2037 = vmatprep.subr.mxu0 %v1473
    %2038 = vmatpush1.msra.mxu0 %v1472
    %2039 = vmatprep.subr.mxu0 %v1475
    %2040 = vmatpush1.msra.mxu0 %v1474
    %2041 = vmatprep.subr.mxu0 %v1477
    %2042 = vmatpush1.msra.mxu0 %v1476
    %2043 = vmatprep.subr.mxu0 %v1479
    %2044 = vmatpush1.msra.mxu0 %v1478
    %2045 = vmatprep.subr.mxu0 %v1481
    %2046 = vmatpush1.msra.mxu0 %v1480
    %2047 = vmatprep.subr.mxu0 %v1483
    %2048 = vmatpush1.msra.mxu0 %v1482
    %2049 = vmatprep.subr.mxu0 %v1485
    %2050 = vmatpush1.msra.mxu0 %v1484
    %2051 = vmatprep.subr.mxu0 %v1487
    %2052 = vmatpush1.msra.mxu0 %v1486
    %2053 = vmatprep.subr.mxu0 %v1489
    %2054 = vmatpush1.msra.mxu0 %v1488
    %2055 = vmatprep.subr.mxu0 %v1491
    %2056 = vmatpush1.msra.mxu0 %v1490
    %2057 = vmatprep.subr.mxu0 %v1493
    %2058 = vmatpush1.msra.mxu0 %v1492
    %2059 = vmatprep.subr.mxu0 %v1495
    %2060 = vmatpush1.msra.mxu0 %v1494
    %2061 = vmatprep.subr.mxu0 %v1497
    %2062 = vmatpush1.msra.mxu0 %v1496
    %2063 = vmatprep.subr.mxu0 %v1499
    %2064 = vmatpush1.msra.mxu0 %v1498
    %2065 = vmatprep.subr.mxu0 %v1501
    %2066 = vmatpush1.msra.mxu0 %v1500
    %2067 = vmatprep.subr.mxu0 %v1503
    %2068 = vmatpush1.msra.mxu0 %v1502
    %2069 = vmatprep.subr.mxu0 %v1505
    %2070 = vmatpush1.msra.mxu0 %v1504
    %2071 = vmatprep.mubr.f32.mxu0 %v894
    %2072 = vmatmul.mubr.f32.gmra.mrb[0].mxu0 %v892
    %v2073 = vpop.f32.mrb[0].mxu0
    %v2074 = vadd.f32 %v2003, %v2073
    %v2075 = vpop.f32.mrb[0].mxu0
    %v2076 = vadd.f32 %v2005, %v2075
    %2077 = vdwg.mxu0
    %2078 = vmatprep.subr.mxu0 %v1507
    %2079 = vmatpush1.msra.mxu0 %v1506
    %2080 = vmatprep.subr.mxu0 %v1509
    %2081 = vmatpush1.msra.mxu0 %v1508
    %2082 = vmatprep.subr.mxu0 %v1511
    %2083 = vmatpush1.msra.mxu0 %v1510
    %2084 = vmatprep.subr.mxu0 %v1513
    %2085 = vmatpush1.msra.mxu0 %v1512
    %2086 = vmatprep.subr.mxu0 %v1515
    %2087 = vmatpush1.msra.mxu0 %v1514
    %2088 = vmatprep.subr.mxu0 %v1517
    %2089 = vmatpush1.msra.mxu0 %v1516
    %2090 = vmatprep.subr.mxu0 %v1519
    %2091 = vmatpush1.msra.mxu0 %v1518
    %2092 = vmatprep.subr.mxu0 %v1521
    %2093 = vmatpush1.msra.mxu0 %v1520
    %2094 = vmatprep.subr.mxu0 %v1523
    %2095 = vmatpush1.msra.mxu0 %v1522
    %2096 = vmatprep.subr.mxu0 %v1525
    %2097 = vmatpush1.msra.mxu0 %v1524
    %2098 = vmatprep.subr.mxu0 %v1527
    %2099 = vmatpush1.msra.mxu0 %v1526
    %2100 = vmatprep.subr.mxu0 %v1529
    %2101 = vmatpush1.msra.mxu0 %v1528
    %2102 = vmatprep.subr.mxu0 %v1531
    %2103 = vmatpush1.msra.mxu0 %v1530
    %2104 = vmatprep.subr.mxu0 %v1533
    %2105 = vmatpush1.msra.mxu0 %v1532
    %2106 = vmatprep.subr.mxu0 %v1535
    %2107 = vmatpush1.msra.mxu0 %v1534
    %2108 = vmatprep.subr.mxu0 %v1537
    %2109 = vmatpush1.msra.mxu0 %v1536
    %2110 = vmatprep.subr.mxu0 %v1539
    %2111 = vmatpush1.msra.mxu0 %v1538
    %2112 = vmatprep.subr.mxu0 %v1541
    %2113 = vmatpush1.msra.mxu0 %v1540
    %2114 = vmatprep.subr.mxu0 %v1543
    %2115 = vmatpush1.msra.mxu0 %v1542
    %2116 = vmatprep.subr.mxu0 %v1545
    %2117 = vmatpush1.msra.mxu0 %v1544
    %2118 = vmatprep.subr.mxu0 %v1547
    %2119 = vmatpush1.msra.mxu0 %v1546
    %2120 = vmatprep.subr.mxu0 %v1549
    %2121 = vmatpush1.msra.mxu0 %v1548
    %2122 = vmatprep.subr.mxu0 %v1551
    %2123 = vmatpush1.msra.mxu0 %v1550
    %2124 = vmatprep.subr.mxu0 %v1553
    %2125 = vmatpush1.msra.mxu0 %v1552
    %2126 = vmatprep.subr.mxu0 %v1555
    %2127 = vmatpush1.msra.mxu0 %v1554
    %2128 = vmatprep.subr.mxu0 %v1557
    %2129 = vmatpush1.msra.mxu0 %v1556
    %2130 = vmatprep.subr.mxu0 %v1559
    %2131 = vmatpush1.msra.mxu0 %v1558
    %2132 = vmatprep.subr.mxu0 %v1561
    %2133 = vmatpush1.msra.mxu0 %v1560
    %2134 = vmatprep.subr.mxu0 %v1563
    %2135 = vmatpush1.msra.mxu0 %v1562
    %2136 = vmatprep.subr.mxu0 %v1565
    %2137 = vmatpush1.msra.mxu0 %v1564
    %2138 = vmatprep.subr.mxu0 %v1567
    %2139 = vmatpush1.msra.mxu0 %v1566
    %2140 = vmatprep.subr.mxu0 %v1569
    %2141 = vmatpush1.msra.mxu0 %v1568
    %2142 = vmatprep.mubr.f32.mxu0 %v965
    %2143 = vmatmul.mubr.f32.gmra.mrb[0].mxu0 %v963
    %v2144 = vpop.f32.mrb[0].mxu0
    %v2145 = vadd.f32 %v2074, %v2144
    %v2146 = vpop.f32.mrb[0].mxu0
    %v2147 = vadd.f32 %v2076, %v2146
    %2148 = vdwg.mxu0
    %2149 = vmatprep.subr.mxu0 %v1571
    %2150 = vmatpush1.msra.mxu0 %v1570
    %2151 = vmatprep.subr.mxu0 %v1573
    %2152 = vmatpush1.msra.mxu0 %v1572
    %2153 = vmatprep.subr.mxu0 %v1575
    %2154 = vmatpush1.msra.mxu0 %v1574
    %2155 = vmatprep.subr.mxu0 %v1577
    %2156 = vmatpush1.msra.mxu0 %v1576
    %2157 = vmatprep.subr.mxu0 %v1579
    %2158 = vmatpush1.msra.mxu0 %v1578
    %2159 = vmatprep.subr.mxu0 %v1581
    %2160 = vmatpush1.msra.mxu0 %v1580
    %2161 = vmatprep.subr.mxu0 %v1583
    %2162 = vmatpush1.msra.mxu0 %v1582
    %2163 = vmatprep.subr.mxu0 %v1585
    %2164 = vmatpush1.msra.mxu0 %v1584
    %2165 = vmatprep.subr.mxu0 %v1587
    %2166 = vmatpush1.msra.mxu0 %v1586
    %2167 = vmatprep.subr.mxu0 %v1589
    %2168 = vmatpush1.msra.mxu0 %v1588
    %2169 = vmatprep.subr.mxu0 %v1591
    %2170 = vmatpush1.msra.mxu0 %v1590
    %2171 = vmatprep.subr.mxu0 %v1593
    %2172 = vmatpush1.msra.mxu0 %v1592
    %2173 = vmatprep.subr.mxu0 %v1595
    %2174 = vmatpush1.msra.mxu0 %v1594
    %2175 = vmatprep.subr.mxu0 %v1597
    %2176 = vmatpush1.msra.mxu0 %v1596
    %2177 = vmatprep.subr.mxu0 %v1599
    %2178 = vmatpush1.msra.mxu0 %v1598
    %2179 = vmatprep.subr.mxu0 %v1601
    %2180 = vmatpush1.msra.mxu0 %v1600
    %2181 = vmatprep.subr.mxu0 %v1603
    %2182 = vmatpush1.msra.mxu0 %v1602
    %2183 = vmatprep.subr.mxu0 %v1605
    %2184 = vmatpush1.msra.mxu0 %v1604
    %2185 = vmatprep.subr.mxu0 %v1607
    %2186 = vmatpush1.msra.mxu0 %v1606
    %2187 = vmatprep.subr.mxu0 %v1609
    %2188 = vmatpush1.msra.mxu0 %v1608
    %2189 = vmatprep.subr.mxu0 %v1611
    %2190 = vmatpush1.msra.mxu0 %v1610
    %2191 = vmatprep.subr.mxu0 %v1613
    %2192 = vmatpush1.msra.mxu0 %v1612
    %2193 = vmatprep.subr.mxu0 %v1615
    %2194 = vmatpush1.msra.mxu0 %v1614
    %2195 = vmatprep.subr.mxu0 %v1617
    %2196 = vmatpush1.msra.mxu0 %v1616
    %2197 = vmatprep.subr.mxu0 %v1619
    %2198 = vmatpush1.msra.mxu0 %v1618
    %2199 = vmatprep.subr.mxu0 %v1621
    %2200 = vmatpush1.msra.mxu0 %v1620
    %2201 = vmatprep.subr.mxu0 %v1623
    %2202 = vmatpush1.msra.mxu0 %v1622
    %2203 = vmatprep.subr.mxu0 %v1625
    %2204 = vmatpush1.msra.mxu0 %v1624
    %2205 = vmatprep.subr.mxu0 %v1627
    %2206 = vmatpush1.msra.mxu0 %v1626
    %2207 = vmatprep.subr.mxu0 %v1629
    %2208 = vmatpush1.msra.mxu0 %v1628
    %2209 = vmatprep.subr.mxu0 %v1631
    %2210 = vmatpush1.msra.mxu0 %v1630
    %2211 = vmatprep.subr.mxu0 %v1633
    %2212 = vmatpush1.msra.mxu0 %v1632
    %2213 = vmatprep.mubr.f32.mxu0 %v1036
    %2214 = vmatmul.mubr.f32.gmra.mrb[0].mxu0 %v1034
    %v2215 = vpop.f32.mrb[0].mxu0
    %v2216 = vadd.f32 %v2145, %v2215
    %v2217 = vpop.f32.mrb[0].mxu0
    %v2218 = vadd.f32 %v2147, %v2217
    %2219 = vdwg.mxu0
    %2220 = vmatprep.subr.mxu0 %v1635
    %2221 = vmatpush1.msra.mxu0 %v1634
    %2222 = vmatprep.subr.mxu0 %v1637
    %2223 = vmatpush1.msra.mxu0 %v1636
    %2224 = vmatprep.subr.mxu0 %v1639
    %2225 = vmatpush1.msra.mxu0 %v1638
    %2226 = vmatprep.subr.mxu0 %v1641
    %2227 = vmatpush1.msra.mxu0 %v1640
    %2228 = vmatprep.subr.mxu0 %v1643
    %2229 = vmatpush1.msra.mxu0 %v1642
    %2230 = vmatprep.subr.mxu0 %v1645
    %2231 = vmatpush1.msra.mxu0 %v1644
    %2232 = vmatprep.subr.mxu0 %v1647
    %2233 = vmatpush1.msra.mxu0 %v1646
    %2234 = vmatprep.subr.mxu0 %v1649
    %2235 = vmatpush1.msra.mxu0 %v1648
    %2236 = vmatprep.subr.mxu0 %v1651
    %2237 = vmatpush1.msra.mxu0 %v1650
    %2238 = vmatprep.subr.mxu0 %v1653
    %2239 = vmatpush1.msra.mxu0 %v1652
    %2240 = vmatprep.subr.mxu0 %v1655
    %2241 = vmatpush1.msra.mxu0 %v1654
    %2242 = vmatprep.subr.mxu0 %v1657
    %2243 = vmatpush1.msra.mxu0 %v1656
    %2244 = vmatprep.subr.mxu0 %v1659
    %2245 = vmatpush1.msra.mxu0 %v1658
    %2246 = vmatprep.subr.mxu0 %v1661
    %2247 = vmatpush1.msra.mxu0 %v1660
    %2248 = vmatprep.subr.mxu0 %v1663
    %2249 = vmatpush1.msra.mxu0 %v1662
    %2250 = vmatprep.subr.mxu0 %v1665
    %2251 = vmatpush1.msra.mxu0 %v1664
    %2252 = vmatprep.subr.mxu0 %v1667
    %2253 = vmatpush1.msra.mxu0 %v1666
    %2254 = vmatprep.subr.mxu0 %v1669
    %2255 = vmatpush1.msra.mxu0 %v1668
    %2256 = vmatprep.subr.mxu0 %v1671
    %2257 = vmatpush1.msra.mxu0 %v1670
    %2258 = vmatprep.subr.mxu0 %v1673
    %2259 = vmatpush1.msra.mxu0 %v1672
    %2260 = vmatprep.subr.mxu0 %v1675
    %2261 = vmatpush1.msra.mxu0 %v1674
    %2262 = vmatprep.subr.mxu0 %v1677
    %2263 = vmatpush1.msra.mxu0 %v1676
    %2264 = vmatprep.subr.mxu0 %v1679
    %2265 = vmatpush1.msra.mxu0 %v1678
    %2266 = vmatprep.subr.mxu0 %v1681
    %2267 = vmatpush1.msra.mxu0 %v1680
    %2268 = vmatprep.subr.mxu0 %v1683
    %2269 = vmatpush1.msra.mxu0 %v1682
    %2270 = vmatprep.subr.mxu0 %v1685
    %2271 = vmatpush1.msra.mxu0 %v1684
    %2272 = vmatprep.subr.mxu0 %v1687
    %2273 = vmatpush1.msra.mxu0 %v1686
    %2274 = vmatprep.subr.mxu0 %v1689
    %2275 = vmatpush1.msra.mxu0 %v1688
    %2276 = vmatprep.subr.mxu0 %v1691
    %2277 = vmatpush1.msra.mxu0 %v1690
    %2278 = vmatprep.subr.mxu0 %v1693
    %2279 = vmatpush1.msra.mxu0 %v1692
    %2280 = vmatprep.subr.mxu0 %v1695
    %2281 = vmatpush1.msra.mxu0 %v1694
    %2282 = vmatprep.subr.mxu0 %v1697
    %2283 = vmatpush1.msra.mxu0 %v1696
    %2284 = vmatprep.mubr.f32.mxu0 %v1107
    %2285 = vmatmul.mubr.f32.gmra.mrb[0].mxu0 %v1105
    %v2286 = vpop.f32.mrb[0].mxu0
    %v2287 = vadd.f32 %v2216, %v2286
    %v2288 = vpop.f32.mrb[0].mxu0
    %v2289 = vadd.f32 %v2218, %v2288
    %2290 = vdwg.mxu0
    %2291 = vmatprep.subr.mxu0 %v1699
    %2292 = vmatpush1.msra.mxu0 %v1698
    %2293 = vmatprep.subr.mxu0 %v1701
    %2294 = vmatpush1.msra.mxu0 %v1700
    %2295 = vmatprep.subr.mxu0 %v1703
    %2296 = vmatpush1.msra.mxu0 %v1702
    %2297 = vmatprep.subr.mxu0 %v1705
    %2298 = vmatpush1.msra.mxu0 %v1704
    %2299 = vmatprep.subr.mxu0 %v1707
    %2300 = vmatpush1.msra.mxu0 %v1706
    %2301 = vmatprep.subr.mxu0 %v1709
    %2302 = vmatpush1.msra.mxu0 %v1708
    %2303 = vmatprep.subr.mxu0 %v1711
    %2304 = vmatpush1.msra.mxu0 %v1710
    %2305 = vmatprep.subr.mxu0 %v1713
    %2306 = vmatpush1.msra.mxu0 %v1712
    %2307 = vmatprep.subr.mxu0 %v1715
    %2308 = vmatpush1.msra.mxu0 %v1714
    %2309 = vmatprep.subr.mxu0 %v1717
    %2310 = vmatpush1.msra.mxu0 %v1716
    %2311 = vmatprep.subr.mxu0 %v1719
    %2312 = vmatpush1.msra.mxu0 %v1718
    %2313 = vmatprep.subr.mxu0 %v1721
    %2314 = vmatpush1.msra.mxu0 %v1720
    %2315 = vmatprep.subr.mxu0 %v1723
    %2316 = vmatpush1.msra.mxu0 %v1722
    %2317 = vmatprep.subr.mxu0 %v1725
    %2318 = vmatpush1.msra.mxu0 %v1724
    %2319 = vmatprep.subr.mxu0 %v1727
    %2320 = vmatpush1.msra.mxu0 %v1726
    %2321 = vmatprep.subr.mxu0 %v1729
    %2322 = vmatpush1.msra.mxu0 %v1728
    %2323 = vmatprep.subr.mxu0 %v1731
    %2324 = vmatpush1.msra.mxu0 %v1730
    %2325 = vmatprep.subr.mxu0 %v1733
    %2326 = vmatpush1.msra.mxu0 %v1732
    %2327 = vmatprep.subr.mxu0 %v1735
    %2328 = vmatpush1.msra.mxu0 %v1734
    %2329 = vmatprep.subr.mxu0 %v1737
    %2330 = vmatpush1.msra.mxu0 %v1736
    %2331 = vmatprep.subr.mxu0 %v1739
    %2332 = vmatpush1.msra.mxu0 %v1738
    %2333 = vmatprep.subr.mxu0 %v1741
    %2334 = vmatpush1.msra.mxu0 %v1740
    %2335 = vmatprep.subr.mxu0 %v1743
    %2336 = vmatpush1.msra.mxu0 %v1742
    %2337 = vmatprep.subr.mxu0 %v1745
    %2338 = vmatpush1.msra.mxu0 %v1744
    %2339 = vmatprep.subr.mxu0 %v1747
    %2340 = vmatpush1.msra.mxu0 %v1746
    %2341 = vmatprep.subr.mxu0 %v1749
    %2342 = vmatpush1.msra.mxu0 %v1748
    %2343 = vmatprep.subr.mxu0 %v1751
    %2344 = vmatpush1.msra.mxu0 %v1750
    %2345 = vmatprep.subr.mxu0 %v1753
    %2346 = vmatpush1.msra.mxu0 %v1752
    %2347 = vmatprep.subr.mxu0 %v1755
    %2348 = vmatpush1.msra.mxu0 %v1754
    %2349 = vmatprep.subr.mxu0 %v1757
    %2350 = vmatpush1.msra.mxu0 %v1756
    %2351 = vmatprep.subr.mxu0 %v1759
    %2352 = vmatpush1.msra.mxu0 %v1758
    %2353 = vmatprep.subr.mxu0 %v1761
    %2354 = vmatpush1.msra.mxu0 %v1760
    %2355 = vmatprep.mubr.f32.mxu0 %v1178
    %2356 = vmatmul.mubr.f32.gmra.mrb[0].mxu0 %v1176
    %v2357 = vpop.f32.mrb[0].mxu0
    %v2358 = vadd.f32 %v2287, %v2357
    %v2359 = vpop.f32.mrb[0].mxu0
    %v2360 = vadd.f32 %v2289, %v2359
    %2361 = vdwg.mxu0
    %2362 = vmatprep.subr.mxu0 %v1763
    %2363 = vmatpush1.msra.mxu0 %v1762
    %2364 = vmatprep.subr.mxu0 %v1765
    %2365 = vmatpush1.msra.mxu0 %v1764
    %2366 = vmatprep.subr.mxu0 %v1767
    %2367 = vmatpush1.msra.mxu0 %v1766
    %2368 = vmatprep.subr.mxu0 %v1769
    %2369 = vmatpush1.msra.mxu0 %v1768
    %2370 = vmatprep.subr.mxu0 %v1771
    %2371 = vmatpush1.msra.mxu0 %v1770
    %2372 = vmatprep.subr.mxu0 %v1773
    %2373 = vmatpush1.msra.mxu0 %v1772
    %2374 = vmatprep.subr.mxu0 %v1775
    %2375 = vmatpush1.msra.mxu0 %v1774
    %2376 = vmatprep.subr.mxu0 %v1777
    %2377 = vmatpush1.msra.mxu0 %v1776
    %2378 = vmatprep.subr.mxu0 %v1779
    %2379 = vmatpush1.msra.mxu0 %v1778
    %2380 = vmatprep.subr.mxu0 %v1781
    %2381 = vmatpush1.msra.mxu0 %v1780
    %2382 = vmatprep.subr.mxu0 %v1783
    %2383 = vmatpush1.msra.mxu0 %v1782
    %2384 = vmatprep.subr.mxu0 %v1785
    %2385 = vmatpush1.msra.mxu0 %v1784
    %2386 = vmatprep.subr.mxu0 %v1787
    %2387 = vmatpush1.msra.mxu0 %v1786
    %2388 = vmatprep.subr.mxu0 %v1789
    %2389 = vmatpush1.msra.mxu0 %v1788
    %2390 = vmatprep.subr.mxu0 %v1791
    %2391 = vmatpush1.msra.mxu0 %v1790
    %2392 = vmatprep.subr.mxu0 %v1793
    %2393 = vmatpush1.msra.mxu0 %v1792
    %2394 = vmatprep.subr.mxu0 0.0
    %2395 = vmatpush1.msra.mxu0 0.0
    %2396 = vmatprep.subr.mxu0 0.0
    %2397 = vmatpush1.msra.mxu0 0.0
    %2398 = vmatprep.subr.mxu0 0.0
    %2399 = vmatpush1.msra.mxu0 0.0
    %2400 = vmatprep.subr.mxu0 0.0
    %2401 = vmatpush1.msra.mxu0 0.0
    %2402 = vmatprep.subr.mxu0 0.0
    %2403 = vmatpush1.msra.mxu0 0.0
    %2404 = vmatprep.subr.mxu0 0.0
    %2405 = vmatpush1.msra.mxu0 0.0
    %2406 = vmatprep.subr.mxu0 0.0
    %2407 = vmatpush1.msra.mxu0 0.0
    %2408 = vmatprep.subr.mxu0 0.0
    %2409 = vmatpush1.msra.mxu0 0.0
    %2410 = vmatprep.subr.mxu0 0.0
    %2411 = vmatpush1.msra.mxu0 0.0
    %2412 = vmatprep.subr.mxu0 0.0
    %2413 = vmatpush1.msra.mxu0 0.0
    %2414 = vmatprep.subr.mxu0 0.0
    %2415 = vmatpush1.msra.mxu0 0.0
    %2416 = vmatprep.subr.mxu0 0.0
    %2417 = vmatpush1.msra.mxu0 0.0
    %2418 = vmatprep.subr.mxu0 0.0
    %2419 = vmatpush1.msra.mxu0 0.0
    %2420 = vmatprep.subr.mxu0 0.0
    %2421 = vmatpush1.msra.mxu0 0.0
    %2422 = vmatprep.subr.mxu0 0.0
    %2423 = vmatpush1.msra.mxu0 0.0
    %2424 = vmatprep.subr.mxu0 0.0
    %2425 = vmatpush1.msra.mxu0 0.0
    %2426 = vmatprep.mubr.f32.mxu0 0.0
    %2427 = vmatmul.mubr.f32.gmra.mrb[0].mxu0 %v1247
    %v2428 = vpop.f32.mrb[0].mxu0
    %v2429 = vadd.f32 %v2358, %v2428
    %v2430 = vpop.f32.mrb[0].mxu0
    %v2431 = vadd.f32 %v2360, %v2430
    %2432 = vdwg.mxu0
    %v2433 = vmax.f32 %v2429, -1.0
    %v2434 = vmax.f32 %v2431, -1.0
    %v2435 = vmin.f32 %v2433, 1.0
    %v2436 = vmin.f32 %v2434, 1.0
    %v2437 = vmul.f32 %v2435, 32767.0
    %v2438 = vmul.f32 %v2436, 32767.0
    %v2439 = vmax.f32 %v2437, -32768.0
    %v2440 = vmax.f32 %v2438, -32768.0
    %v2441 = vmin.f32 %v2439, 32767.0
    %v2442 = vmin.f32 %v2440, 32767.0
    %v2443 = vcvt.f32.s32.to.zero.pseudo %v2441
    %v2444 = vcvt.f32.s32.to.zero.pseudo %v2442
    %v2445 = vpack.c.b16 %v2443, %v2443
    %v2446 = vpack.c.b16 %v2444, %v2444
    %v2447 = vcombine.low %v2445, %v2446
    %v2449 = vunpack.c.l.s4 1966171168
    %v2450 = vunpack.c.0.s8 %v2449
    %v2451 = vlaneseq
    %v2452 = vshrl.u32 %v2451, 7
    %v2453 = vsub.s32 %v2450, %v2452
    %v2454 = vrot.slane %v2447, %v2453
    %v2456 = vunpack.c.l.s4 1966171168
    %v2457 = vunpack.c.0.s8 %v2456
    %v2458 = vlaneseq
    %v2459 = vshrl.u32 %v2458, 7
    %v2460 = vsub.s32 %v2457, %v2459
    %v2461 = vrot.slane %v2454, %v2460
    %2462 = vst [vmem:[#allocation8] sm:$0x3] %v2461
    // Predicated region
    $region26: #{fused_forward.1} parent=1 // pred_check
      _
    $region27: #{fused_forward.1} parent=1 // pred_check_branch
      %2464 = sbr.rel (0) target = $region29
    $region28: #{fused_forward.1} parent=1 // pred_region
      %s2466 = ssub.s32 32, 32
      %2467 = vsyncadd [#allocation4], %s2466
      %s2469 = sshll.u32 [#allocation8], 4
      %s2470 = int_to_ptr.vmem [resolvable:$true] %s2469
      %2472 = dma.vmem_to_hbm [thread:$0]  %s2470, 32, %s3, [#allocation4]
    $region29: #{fused_forward.1} parent=1 // pred_fallthru
      _
    // Predicated region
    $region30: #{fused_forward.1} parent=1 // pred_check
      _
    $region31: #{fused_forward.1} parent=1 // pred_check_branch
      %2474 = sbr.rel (0) target = $region33
    $region32: #{fused_forward.1} parent=1 // pred_region
      %2475 = dma.done [#allocation4], 32
    $region33: #{fused_forward.1} parent=1 // pred_fallthru
      _
    %2476 = vsyncpa [#allocation3], 1
    %2477 = vsyncpa [#allocation6], 1
    %2478 = vsyncpa [#allocation4], 1

</llo_original>
